<compile_context>
chip_gen: v6e
topology: v6e:2x2x1
jax: 0.10.0
libtpu: 0.0.40
codegen_flags: <defaults>
</compile_context>

<pallas_src>
import functools

import jax
import jax.numpy as jnp
from jax import lax
from jax.experimental import pallas as pl
from jax.experimental.pallas import tpu as pltpu

EPS = 1e-5  # PyTorch GroupNorm default eps


def _attention_kernel(x_ref, g_ref, w1x_ref, w1g_ref, sel_ref, selt_ref,
                      gn1_ref, w2_ref, gn2_ref, o_ref,
                      sum_ref, sq_ref, y2_ref, *, num_groups, hw_chunk):
    ci = x_ref.shape[1]
    hw = x_ref.shape[2]
    gs = ci // num_groups
    n_chunks = hw // hw_chunk

    def for_chunks(body):
        # Single-chunk case stays fully static; otherwise an scf.for over chunks
        # bounds live ranges and keeps the f32 intermediates to one chunk.
        if n_chunks == 1:
            body(0)
        else:
            @pl.loop(0, n_chunks)
            def _(c):
                body(pl.multiple_of(c * hw_chunk, hw_chunk))

    def y1_chunk(start):
        # Conv2d(Ci+Cg -> Ci, k=1, bias=False) on one HW chunk: two MXU matmuls,
        # no (Ci+Cg, HW) concat buffer is ever materialized.
        xs = x_ref[0, :, pl.ds(start, hw_chunk)]
        gt = g_ref[0, :, pl.ds(start, hw_chunk)]
        return (jnp.dot(w1x_ref[...], xs, preferred_element_type=jnp.float32) +
                jnp.dot(w1g_ref[...], gt, preferred_element_type=jnp.float32))

    # ---- Pass 1: per-channel moments of y1 (scratch persists -> re-init) ----
    sum_ref[...] = jnp.zeros_like(sum_ref)
    sq_ref[...] = jnp.zeros_like(sq_ref)

    def pass1(start):
        y1 = y1_chunk(start)
        sum_ref[...] += jnp.sum(y1, axis=1, keepdims=True)
        sq_ref[...] += jnp.sum(y1 * y1, axis=1, keepdims=True)

    for_chunks(pass1)

    # ---- GroupNorm(num_groups, Ci) statistics via two tiny MXU matmuls ----
    # group moments = sel (G,Ci) @ [sum_c | sq_c] (Ci,2) -> (G,2)
    stats_c = jnp.concatenate([sum_ref[...], sq_ref[...]], axis=1)        # (Ci,2)
    grp = jnp.dot(sel_ref[...], stats_c, preferred_element_type=jnp.float32)
    inv_n = 1.0 / jnp.float32(hw * gs)
    g_mean = grp[:, 0:1] * inv_n                                          # (G,1)
    g_var = jnp.maximum(grp[:, 1:2] * inv_n - g_mean * g_mean, 0.0)       # clamp >= 0
    g_rstd = lax.rsqrt(g_var + EPS)
    # broadcast back per channel: selT (Ci,G) @ [mean | rstd] (G,2) -> (Ci,2)
    ch = jnp.dot(selt_ref[...], jnp.concatenate([g_mean, g_rstd], axis=1),
                 preferred_element_type=jnp.float32)
    # fold GN1 affine into one scale/shift per channel (single FMA per element)
    scale1 = ch[:, 1:2] * gn1_ref[:, 0:1]                                 # rstd*gamma
    shift1 = gn1_ref[:, 1:2] - ch[:, 0:1] * scale1                        # beta - mean*scale

    # ---- Pass 2: recompute y1 chunk, GN1+ReLU, Conv(Ci->1) on the MXU ----
    w2 = w2_ref[...].astype(jnp.float32)                                  # (1, Ci)

    def pass2(start):
        y1r = jnp.maximum(y1_chunk(start) * scale1 + shift1, 0.0)
        y2_ref[:, pl.ds(start, hw_chunk)] = jnp.dot(
            w2, y1r, preferred_element_type=jnp.float32)                  # (1, hwc)

    for_chunks(pass2)

    # ---- GroupNorm(1, 1): stats over the tiny (1, HW) VMEM buffer ----
    y2 = y2_ref[...]
    inv_hw = 1.0 / jnp.float32(hw)
    m2 = jnp.sum(y2) * inv_hw
    v2 = jnp.maximum(jnp.sum(y2 * y2) * inv_hw - m2 * m2, 0.0)
    a2 = lax.rsqrt(v2 + EPS) * gn2_ref[0]                                 # SMEM scalars
    b2 = gn2_ref[1] - m2 * a2

    # ---- Pass 3: sigmoid gate and apply to the input features ----
    def pass3(start):
        alphas = jax.nn.sigmoid(y2_ref[:, pl.ds(start, hw_chunk)] * a2 + b2)  # (1,hwc)
        xs = x_ref[0, :, pl.ds(start, hw_chunk)]   # fresh VMEM load, no long live range
        o_ref[0, :, pl.ds(start, hw_chunk)] = (
            xs.astype(jnp.float32) * alphas).astype(o_ref.dtype)

    for_chunks(pass3)


def _pick_hw_chunk(ci, hw, budget_bytes=2 * 1024 * 1024):
    """Largest HW chunk (multiple of 128, dividing HW) whose f32 (Ci, chunk)
    intermediate stays within ~budget_bytes."""
    if ci * hw * 4 <= budget_bytes or hw % 128 != 0:
        # TODO(synk): ragged chunking for HW not a multiple of 128.
        return hw
    target = max(128, (budget_bytes // (ci * 4)) // 128 * 128)
    best = 128
    for c in range(128, min(hw, target) + 1, 128):
        if hw % c == 0:
            best = c
    return best


def _vmem_limit_bytes():
    # Trace-time capacity query (128 MiB v5e/v6e, 64 MiB v7x); leave headroom.
    try:
        cap = int(pltpu.get_tpu_info().vmem_capacity_bytes)
    except Exception:
        cap = 64 * 1024 * 1024
    return max(cap - 16 * 1024 * 1024, 32 * 1024 * 1024)


def attention_module(x_nchw, g_nchw, params, *, num_groups):
    """Wrapper: NCHW in / NCHW out (matches the PyTorch module). No transposes."""
    w1, gn1_gamma, gn1_beta, w2, gn2_gamma, gn2_beta = params
    B, Ci, H, W = x_nchw.shape
    Cg = g_nchw.shape[1]
    HW = H * W
    gs = Ci // num_groups

    # Flatten spatial dims only (contiguous reshape, no HBM transpose).
    x = x_nchw.reshape(B, Ci, HW)
    g = g_nchw.reshape(B, Cg, HW)

    # Host-side parameter packing (once).
    w1x = w1[:, :Ci]                                             # (Ci, Ci)
    w1g = w1[:, Ci:]                                             # (Ci, Cg)
    gn1 = jnp.stack([gn1_gamma, gn1_beta], axis=1).astype(jnp.float32)   # (Ci, 2)
    w2c = jnp.reshape(w2, (1, Ci))                               # (1, Ci) MXU lhs
    gn2 = jnp.stack([jnp.asarray(gn2_gamma, jnp.float32),
                     jnp.asarray(gn2_beta, jnp.float32)])        # (2,) -> SMEM
    # Group-selector matrices for MXU-based GroupNorm statistics.
    sel = (jnp.arange(Ci, dtype=jnp.int32)[None, :] // gs ==
           jnp.arange(num_groups, dtype=jnp.int32)[:, None]).astype(jnp.float32)
    selt = jnp.transpose(sel)                                    # (Ci, G)

    hw_chunk = _pick_hw_chunk(Ci, HW)

    kernel = functools.partial(_attention_kernel, num_groups=num_groups,
                               hw_chunk=hw_chunk)
    out = pl.pallas_call(
        kernel,
        out_shape=jax.ShapeDtypeStruct((B, Ci, HW), x_nchw.dtype),
        grid_spec=pltpu.PrefetchScalarGridSpec(
            num_scalar_prefetch=0,
            grid=(B,),
            in_specs=[
                pl.BlockSpec((1, Ci, HW), lambda b: (b, 0, 0)),           # x
                pl.BlockSpec((1, Cg, HW), lambda b: (b, 0, 0)),           # gating
                pl.BlockSpec((Ci, Ci), lambda b: (0, 0)),                 # conv1 W (input half)
                pl.BlockSpec((Ci, Cg), lambda b: (0, 0)),                 # conv1 W (gating half)
                pl.BlockSpec((num_groups, Ci), lambda b: (0, 0)),         # group selector
                pl.BlockSpec((Ci, num_groups), lambda b: (0, 0)),         # selector transpose
                pl.BlockSpec((Ci, 2), lambda b: (0, 0)),                  # GN1 gamma/beta
                pl.BlockSpec((1, Ci), lambda b: (0, 0)),                  # conv2 W
                pl.BlockSpec(memory_space=pltpu.MemorySpace.SMEM),        # GN2 gamma/beta
            ],
            out_specs=pl.BlockSpec((1, Ci, HW), lambda b: (b, 0, 0)),
            scratch_shapes=[
                pltpu.VMEM((Ci, 1), jnp.float32),     # per-channel sum
                pltpu.VMEM((Ci, 1), jnp.float32),     # per-channel sumsq
                pltpu.VMEM((1, HW), jnp.float32),     # y2 (single gating channel)
            ],
        ),
        compiler_params=pltpu.CompilerParams(
            dimension_semantics=("parallel",),
            vmem_limit_bytes=_vmem_limit_bytes(),
        ),
    )(x, g, w1x, w1g, sel, selt, gn1, w2c, gn2)

    return out.reshape(B, Ci, H, W)


def _reference(x, g, params, num_groups):
    """Pure-JAX reference reproducing the PyTorch forward (for validation)."""
    w1, g1w, g1b, w2, g2w, g2b = params
    B, Ci, H, W = x.shape
    gs = Ci // num_groups
    cat = jnp.concatenate([x, g], axis=1)
    y1 = jnp.einsum('oc,bchw->bohw', w1, cat)
    y1g = y1.reshape(B, num_groups, gs, H, W)
    m = y1g.mean(axis=(2, 3, 4), keepdims=True)
    v = y1g.var(axis=(2, 3, 4), keepdims=True)
    y1n = ((y1g - m) / jnp.sqrt(v + EPS)).reshape(B, Ci, H, W)
    y1n = y1n * g1w[None, :, None, None] + g1b[None, :, None, None]
    y1r = jnp.maximum(y1n, 0.0)
    y2 = jnp.einsum('oc,bchw->bohw', w2.reshape(1, Ci), y1r)
    m2 = y2.mean(axis=(1, 2, 3), keepdims=True)
    v2 = y2.var(axis=(1, 2, 3), keepdims=True)
    y2n = (y2 - m2) / jnp.sqrt(v2 + EPS) * g2w + g2b
    return x * jax.nn.sigmoid(y2n)


if __name__ == "__main__":
    # Small shapes consistent with the module: Ci must be divisible by 8.
    B, Ci, Cg, H, W = 2, 16, 16, 16, 16
    num_groups = Ci // 8

    key = jax.random.PRNGKey(0)
    kx, kg, kw1, kw2, kg1w, kg1b, kg2 = jax.random.split(key, 7)

    x = jax.random.normal(kx, (B, Ci, H, W), jnp.float32)
    g = jax.random.normal(kg, (B, Cg, H, W), jnp.float32)

    # Deterministic synthetic parameters in PyTorch-native layouts:
    w1 = 0.1 * jax.random.normal(kw1, (Ci, Ci + Cg), jnp.float32)   # Conv2d(Ci+Cg, Ci, 1).weight[:, :, 0, 0]
    w2 = 0.1 * jax.random.normal(kw2, (1, Ci), jnp.float32)         # Conv2d(Ci, 1, 1).weight[:, :, 0, 0]
    gn1_gamma = 1.0 + 0.1 * jax.random.normal(kg1w, (Ci,), jnp.float32)   # GroupNorm(Ci//8, Ci).weight
    gn1_beta = 0.1 * jax.random.normal(kg1b, (Ci,), jnp.float32)          # GroupNorm(Ci//8, Ci).bias
    gn2_vals = 0.1 * jax.random.normal(kg2, (2,), jnp.float32)
    gn2_gamma = 1.0 + gn2_vals[0]                                         # GroupNorm(1, 1).weight
    gn2_beta = gn2_vals[1]                                                # GroupNorm(1, 1).bias
    params = (w1, gn1_gamma, gn1_beta, w2, gn2_gamma, gn2_beta)

    out = attention_module(x, g, params, num_groups=num_groups)
    out = jax.block_until_ready(out)

    ref = _reference(x, g, params, num_groups)
    assert out.shape == (B, Ci, H, W)
    assert jnp.allclose(out, ref, atol=1e-4, rtol=1e-4), "mismatch vs reference"

    print("KERNEL_OK")
</pallas_src>

<mosaic_0001>
module attributes {stable_mosaic.version = 11 : i64} {
  func.func @_attention_kernel(%arg0: i32, %arg1: memref<1x16x256xf32, #tpu.memory_space<vmem>>, %arg2: memref<1x16x256xf32, #tpu.memory_space<vmem>>, %arg3: memref<16x16xf32, #tpu.memory_space<vmem>>, %arg4: memref<16x16xf32, #tpu.memory_space<vmem>>, %arg5: memref<2x16xf32, #tpu.memory_space<vmem>>, %arg6: memref<16x2xf32, #tpu.memory_space<vmem>>, %arg7: memref<16x2xf32, #tpu.memory_space<vmem>>, %arg8: memref<1x16xf32, #tpu.memory_space<vmem>>, %arg9: memref<2xf32, #tpu.memory_space<smem>>, %arg10: memref<1x16x256xf32, #tpu.memory_space<vmem>>, %arg11: memref<16x1xf32, #tpu.memory_space<vmem>>, %arg12: memref<16x1xf32, #tpu.memory_space<vmem>>, %arg13: memref<1x256xf32, #tpu.memory_space<vmem>>) attributes {dimension_semantics = [#tpu.dimension_semantics<parallel>], iteration_bounds = array<i64: 2>, scalar_prefetch = 0 : i64, scratch_operands = 3 : i64, tpu.core_type = #tpu.core_type<tc>, window_params = [{transform_indices = @transform_0, window_bounds = array<i64: 1, 16, 256>}, {transform_indices = @transform_1, window_bounds = array<i64: 1, 16, 256>}, {pipeline_mode = #tpu.pipeline_mode<synchronous>, transform_indices = @transform_2, window_bounds = array<i64: 16, 16>}, {pipeline_mode = #tpu.pipeline_mode<synchronous>, transform_indices = @transform_3, window_bounds = array<i64: 16, 16>}, {pipeline_mode = #tpu.pipeline_mode<synchronous>, transform_indices = @transform_4, window_bounds = array<i64: 2, 16>}, {pipeline_mode = #tpu.pipeline_mode<synchronous>, transform_indices = @transform_5, window_bounds = array<i64: 16, 2>}, {pipeline_mode = #tpu.pipeline_mode<synchronous>, transform_indices = @transform_6, window_bounds = array<i64: 16, 2>}, {pipeline_mode = #tpu.pipeline_mode<synchronous>, transform_indices = @transform_7, window_bounds = array<i64: 1, 16>}, {transform_indices = @transform_8, window_bounds = array<i64: 2>}, {transform_indices = @transform_9, window_bounds = array<i64: 1, 16, 256>}]} {
    %cst = arith.constant 0.000000e+00 : f32
    %0 = vector.broadcast %cst : f32 to vector<16x1xf32>
    %c0 = arith.constant 0 : index
    %c0_0 = arith.constant 0 : index
    %1 = vector.load %arg11[%c0, %c0_0] : memref<16x1xf32, #tpu.memory_space<vmem>>, vector<16x1xf32>
    tpu.vector_store %arg11[%c0, %c0_0], %0 {strides = array<i32>} : memref<16x1xf32, #tpu.memory_space<vmem>>, vector<16x1xf32>,
    %cst_1 = arith.constant 0.000000e+00 : f32
    %2 = vector.broadcast %cst_1 : f32 to vector<16x1xf32>
    %c0_2 = arith.constant 0 : index
    %c0_3 = arith.constant 0 : index
    %3 = vector.load %arg12[%c0_2, %c0_3] : memref<16x1xf32, #tpu.memory_space<vmem>>, vector<16x1xf32>
    tpu.vector_store %arg12[%c0_2, %c0_3], %2 {strides = array<i32>} : memref<16x1xf32, #tpu.memory_space<vmem>>, vector<16x1xf32>,
    %c0_4 = arith.constant 0 : index
    %c0_5 = arith.constant 0 : index
    %c0_6 = arith.constant 0 : index
    %4 = vector.load %arg1[%c0_4, %c0_5, %c0_6] : memref<1x16x256xf32, #tpu.memory_space<vmem>>, vector<1x16x256xf32>
    %5 = vector.shape_cast %4 : vector<1x16x256xf32> to vector<16x256xf32>
    %c0_7 = arith.constant 0 : index
    %c0_8 = arith.constant 0 : index
    %c0_9 = arith.constant 0 : index
    %6 = vector.load %arg2[%c0_7, %c0_8, %c0_9] : memref<1x16x256xf32, #tpu.memory_space<vmem>>, vector<1x16x256xf32>
    %7 = vector.shape_cast %6 : vector<1x16x256xf32> to vector<16x256xf32>
    %c0_10 = arith.constant 0 : index
    %c0_11 = arith.constant 0 : index
    %8 = vector.load %arg3[%c0_10, %c0_11] : memref<16x16xf32, #tpu.memory_space<vmem>>, vector<16x16xf32>
    %cst_12 = arith.constant dense<0.000000e+00> : vector<16x256xf32>
    %9 = tpu.matmul %8, %5, %cst_12 {dimension_numbers = #tpu.dot_dimension_numbers<[1], [0], [0], [1], [0, 0, 1, 1], [], []>} : vector<16x16xf32>, vector<16x256xf32>, vector<16x256xf32> -> vector<16x256xf32>
    %c0_13 = arith.constant 0 : index
    %c0_14 = arith.constant 0 : index
    %10 = vector.load %arg4[%c0_13, %c0_14] : memref<16x16xf32, #tpu.memory_space<vmem>>, vector<16x16xf32>
    %cst_15 = arith.constant dense<0.000000e+00> : vector<16x256xf32>
    %11 = tpu.matmul %10, %7, %cst_15 {dimension_numbers = #tpu.dot_dimension_numbers<[1], [0], [0], [1], [0, 0, 1, 1], [], []>} : vector<16x16xf32>, vector<16x256xf32>, vector<16x256xf32> -> vector<16x256xf32>
    %12 = arith.addf %9, %11 : vector<16x256xf32>
    %c0_16 = arith.constant 0 : index
    %c0_17 = arith.constant 0 : index
    %13 = vector.load %arg11[%c0_16, %c0_17] : memref<16x1xf32, #tpu.memory_space<vmem>>, vector<16x1xf32>
    %cst_18 = arith.constant dense<0.000000e+00> : vector<16xf32>
    %14 = vector.multi_reduction <add>, %12, %cst_18 [1] : vector<16x256xf32> to vector<16xf32>
    %15 = vector.shape_cast %14 : vector<16xf32> to vector<16x1xf32>
    %16 = arith.addf %13, %15 : vector<16x1xf32>
    %c0_19 = arith.constant 0 : index
    %c0_20 = arith.constant 0 : index
    %17 = vector.load %arg11[%c0_19, %c0_20] : memref<16x1xf32, #tpu.memory_space<vmem>>, vector<16x1xf32>
    tpu.vector_store %arg11[%c0_19, %c0_20], %16 {strides = array<i32>} : memref<16x1xf32, #tpu.memory_space<vmem>>, vector<16x1xf32>,
    %c0_21 = arith.constant 0 : index
    %c0_22 = arith.constant 0 : index
    %18 = vector.load %arg12[%c0_21, %c0_22] : memref<16x1xf32, #tpu.memory_space<vmem>>, vector<16x1xf32>
    %19 = arith.mulf %12, %12 : vector<16x256xf32>
    %cst_23 = arith.constant dense<0.000000e+00> : vector<16xf32>
    %20 = vector.multi_reduction <add>, %19, %cst_23 [1] : vector<16x256xf32> to vector<16xf32>
    %21 = vector.shape_cast %20 : vector<16xf32> to vector<16x1xf32>
    %22 = arith.addf %18, %21 : vector<16x1xf32>
    %c0_24 = arith.constant 0 : index
    %c0_25 = arith.constant 0 : index
    %23 = vector.load %arg12[%c0_24, %c0_25] : memref<16x1xf32, #tpu.memory_space<vmem>>, vector<16x1xf32>
    tpu.vector_store %arg12[%c0_24, %c0_25], %22 {strides = array<i32>} : memref<16x1xf32, #tpu.memory_space<vmem>>, vector<16x1xf32>,
    %c0_26 = arith.constant 0 : index
    %c0_27 = arith.constant 0 : index
    %24 = vector.load %arg11[%c0_26, %c0_27] : memref<16x1xf32, #tpu.memory_space<vmem>>, vector<16x1xf32>
    %c0_28 = arith.constant 0 : index
    %c0_29 = arith.constant 0 : index
    %25 = vector.load %arg12[%c0_28, %c0_29] : memref<16x1xf32, #tpu.memory_space<vmem>>, vector<16x1xf32>
    %26 = tpu.concatenate %24, %25 in 1 : vector<16x1xf32>, vector<16x1xf32> -> vector<16x2xf32>
    %c0_30 = arith.constant 0 : index
    %c0_31 = arith.constant 0 : index
    %27 = vector.load %arg5[%c0_30, %c0_31] : memref<2x16xf32, #tpu.memory_space<vmem>>, vector<2x16xf32>
    %cst_32 = arith.constant dense<0.000000e+00> : vector<2x2xf32>
    %28 = tpu.matmul %27, %26, %cst_32 {dimension_numbers = #tpu.dot_dimension_numbers<[1], [0], [0], [1], [0, 0, 1, 1], [], []>} : vector<2x16xf32>, vector<16x2xf32>, vector<2x2xf32> -> vector<2x2xf32>
    %cst_33 = arith.constant 1.000000e+00 : f32
    %cst_34 = arith.constant 2.048000e+03 : f32
    %29 = arith.divf %cst_33, %cst_34 : f32
    %30 = vector.extract_strided_slice %28 {offsets = [0, 0], sizes = [2, 1], strides = [1, 1]} : vector<2x2xf32> to vector<2x1xf32>
    %31 = vector.broadcast %29 : f32 to vector<2x1xf32>
    %32 = arith.mulf %30, %31 : vector<2x1xf32>
    %33 = vector.extract_strided_slice %28 {offsets = [0, 1], sizes = [2, 1], strides = [1, 1]} : vector<2x2xf32> to vector<2x1xf32>
    %34 = vector.broadcast %29 : f32 to vector<2x1xf32>
    %35 = arith.mulf %33, %34 : vector<2x1xf32>
    %36 = arith.mulf %32, %32 : vector<2x1xf32>
    %37 = arith.subf %35, %36 : vector<2x1xf32>
    %cst_35 = arith.constant 0.000000e+00 : f32
    %38 = vector.broadcast %cst_35 : f32 to vector<2x1xf32>
    %39 = arith.maximumf %37, %38 : vector<2x1xf32>
    %cst_36 = arith.constant 9.99999974E-6 : f32
    %40 = vector.broadcast %cst_36 : f32 to vector<2x1xf32>
    %41 = arith.addf %39, %40 : vector<2x1xf32>
    %42 = math.rsqrt %41 : vector<2x1xf32>
    %c0_37 = arith.constant 0 : index
    %c0_38 = arith.constant 0 : index
    %43 = vector.load %arg6[%c0_37, %c0_38] : memref<16x2xf32, #tpu.memory_space<vmem>>, vector<16x2xf32>
    %44 = tpu.concatenate %32, %42 in 1 : vector<2x1xf32>, vector<2x1xf32> -> vector<2x2xf32>
    %cst_39 = arith.constant dense<0.000000e+00> : vector<16x2xf32>
    %45 = tpu.matmul %43, %44, %cst_39 {dimension_numbers = #tpu.dot_dimension_numbers<[1], [0], [0], [1], [0, 0, 1, 1], [], []>} : vector<16x2xf32>, vector<2x2xf32>, vector<16x2xf32> -> vector<16x2xf32>
    %46 = vector.extract_strided_slice %45 {offsets = [0, 1], sizes = [16, 1], strides = [1, 1]} : vector<16x2xf32> to vector<16x1xf32>
    %c0_40 = arith.constant 0 : index
    %c0_41 = arith.constant 0 : index
    %47 = vector.load %arg7[%c0_40, %c0_41] : memref<16x2xf32, #tpu.memory_space<vmem>>, vector<16x1xf32>
    %48 = arith.mulf %46, %47 : vector<16x1xf32>
    %c0_42 = arith.constant 0 : index
    %c1 = arith.constant 1 : index
    %49 = vector.load %arg7[%c0_42, %c1] : memref<16x2xf32, #tpu.memory_space<vmem>>, vector<16x1xf32>
    %50 = vector.extract_strided_slice %45 {offsets = [0, 0], sizes = [16, 1], strides = [1, 1]} : vector<16x2xf32> to vector<16x1xf32>
    %51 = arith.mulf %50, %48 : vector<16x1xf32>
    %52 = arith.subf %49, %51 : vector<16x1xf32>
    %c0_43 = arith.constant 0 : index
    %c0_44 = arith.constant 0 : index
    %53 = vector.load %arg8[%c0_43, %c0_44] : memref<1x16xf32, #tpu.memory_space<vmem>>, vector<1x16xf32>
    %c0_45 = arith.constant 0 : index
    %c0_46 = arith.constant 0 : index
    %c0_47 = arith.constant 0 : index
    %54 = vector.load %arg1[%c0_45, %c0_46, %c0_47] : memref<1x16x256xf32, #tpu.memory_space<vmem>>, vector<1x16x256xf32>
    %55 = vector.shape_cast %54 : vector<1x16x256xf32> to vector<16x256xf32>
    %c0_48 = arith.constant 0 : index
    %c0_49 = arith.constant 0 : index
    %c0_50 = arith.constant 0 : index
    %56 = vector.load %arg2[%c0_48, %c0_49, %c0_50] : memref<1x16x256xf32, #tpu.memory_space<vmem>>, vector<1x16x256xf32>
    %57 = vector.shape_cast %56 : vector<1x16x256xf32> to vector<16x256xf32>
    %c0_51 = arith.constant 0 : index
    %c0_52 = arith.constant 0 : index
    %58 = vector.load %arg3[%c0_51, %c0_52] : memref<16x16xf32, #tpu.memory_space<vmem>>, vector<16x16xf32>
    %cst_53 = arith.constant dense<0.000000e+00> : vector<16x256xf32>
    %59 = tpu.matmul %58, %55, %cst_53 {dimension_numbers = #tpu.dot_dimension_numbers<[1], [0], [0], [1], [0, 0, 1, 1], [], []>} : vector<16x16xf32>, vector<16x256xf32>, vector<16x256xf32> -> vector<16x256xf32>
    %c0_54 = arith.constant 0 : index
    %c0_55 = arith.constant 0 : index
    %60 = vector.load %arg4[%c0_54, %c0_55] : memref<16x16xf32, #tpu.memory_space<vmem>>, vector<16x16xf32>
    %cst_56 = arith.constant dense<0.000000e+00> : vector<16x256xf32>
    %61 = tpu.matmul %60, %57, %cst_56 {dimension_numbers = #tpu.dot_dimension_numbers<[1], [0], [0], [1], [0, 0, 1, 1], [], []>} : vector<16x16xf32>, vector<16x256xf32>, vector<16x256xf32> -> vector<16x256xf32>
    %62 = arith.addf %59, %61 : vector<16x256xf32>
    %63 = vector.broadcast %48 : vector<16x1xf32> to vector<16x256xf32>
    %64 = arith.mulf %62, %63 : vector<16x256xf32>
    %65 = vector.broadcast %52 : vector<16x1xf32> to vector<16x256xf32>
    %66 = arith.addf %64, %65 : vector<16x256xf32>
    %cst_57 = arith.constant 0.000000e+00 : f32
    %67 = vector.broadcast %cst_57 : f32 to vector<16x256xf32>
    %68 = arith.maximumf %66, %67 : vector<16x256xf32>
    %cst_58 = arith.constant dense<0.000000e+00> : vector<1x256xf32>
    %69 = tpu.matmul %53, %68, %cst_58 {dimension_numbers = #tpu.dot_dimension_numbers<[1], [0], [0], [1], [0, 0, 1, 1], [], []>} : vector<1x16xf32>, vector<16x256xf32>, vector<1x256xf32> -> vector<1x256xf32>
    %c0_59 = arith.constant 0 : index
    %c0_60 = arith.constant 0 : index
    %70 = vector.load %arg13[%c0_59, %c0_60] : memref<1x256xf32, #tpu.memory_space<vmem>>, vector<1x256xf32>
    tpu.vector_store %arg13[%c0_59, %c0_60], %69 {strides = array<i32>} : memref<1x256xf32, #tpu.memory_space<vmem>>, vector<1x256xf32>,
    %c0_61 = arith.constant 0 : index
    %c0_62 = arith.constant 0 : index
    %71 = vector.load %arg13[%c0_61, %c0_62] : memref<1x256xf32, #tpu.memory_space<vmem>>, vector<1x256xf32>
    %cst_63 = arith.constant 1.000000e+00 : f32
    %cst_64 = arith.constant 2.560000e+02 : f32
    %72 = arith.divf %cst_63, %cst_64 : f32
    %73 = vector.shape_cast %71 : vector<1x256xf32> to vector<1x1x256xf32>
    %cst_65 = arith.constant dense<0.000000e+00> : vector<1xf32>
    %74 = vector.multi_reduction <add>, %73, %cst_65 [1, 2] : vector<1x1x256xf32> to vector<1xf32>
    %75 = vector.shape_cast %74 : vector<1xf32> to vector<1x1x1xf32>
    %76 = vector.extract %75[0, 0, 0] : f32 from vector<1x1x1xf32>
    %77 = arith.mulf %76, %72 : f32
    %78 = arith.mulf %71, %71 : vector<1x256xf32>
    %79 = vector.shape_cast %78 : vector<1x256xf32> to vector<1x1x256xf32>
    %cst_66 = arith.constant dense<0.000000e+00> : vector<1xf32>
    %80 = vector.multi_reduction <add>, %79, %cst_66 [1, 2] : vector<1x1x256xf32> to vector<1xf32>
    %81 = vector.shape_cast %80 : vector<1xf32> to vector<1x1x1xf32>
    %82 = vector.extract %81[0, 0, 0] : f32 from vector<1x1x1xf32>
    %83 = arith.mulf %82, %72 : f32
    %84 = arith.mulf %77, %77 : f32
    %85 = arith.subf %83, %84 : f32
    %cst_67 = arith.constant 0.000000e+00 : f32
    %86 = arith.maximumf %85, %cst_67 : f32
    %cst_68 = arith.constant 9.99999974E-6 : f32
    %87 = arith.addf %86, %cst_68 : f32
    %88 = math.rsqrt %87 : f32
    %c0_69 = arith.constant 0 : index
    %89 = memref.load %arg9[%c0_69] : memref<2xf32, #tpu.memory_space<smem>>
    %90 = arith.mulf %88, %89 : f32
    %c1_70 = arith.constant 1 : index
    %91 = memref.load %arg9[%c1_70] : memref<2xf32, #tpu.memory_space<smem>>
    %92 = arith.mulf %77, %90 : f32
    %93 = arith.subf %91, %92 : f32
    %c0_71 = arith.constant 0 : index
    %c0_72 = arith.constant 0 : index
    %94 = vector.load %arg13[%c0_71, %c0_72] : memref<1x256xf32, #tpu.memory_space<vmem>>, vector<1x256xf32>
    %95 = vector.broadcast %90 : f32 to vector<1x256xf32>
    %96 = arith.mulf %94, %95 : vector<1x256xf32>
    %97 = vector.broadcast %93 : f32 to vector<1x256xf32>
    %98 = arith.addf %96, %97 : vector<1x256xf32>
    %99 = arith.negf %98 : vector<1x256xf32>
    %100 = math.exp %99 : vector<1x256xf32>
    %cst_73 = arith.constant 1.000000e+00 : f32
    %101 = vector.broadcast %cst_73 : f32 to vector<1x256xf32>
    %102 = arith.addf %101, %100 : vector<1x256xf32>
    %103 = arith.divf %101, %102 : vector<1x256xf32>
    %c0_74 = arith.constant 0 : index
    %c0_75 = arith.constant 0 : index
    %c0_76 = arith.constant 0 : index
    %104 = vector.load %arg1[%c0_74, %c0_75, %c0_76] : memref<1x16x256xf32, #tpu.memory_space<vmem>>, vector<1x16x256xf32>
    %105 = vector.shape_cast %104 : vector<1x16x256xf32> to vector<16x256xf32>
    %106 = vector.broadcast %103 : vector<1x256xf32> to vector<16x256xf32>
    %107 = arith.mulf %105, %106 : vector<16x256xf32>
    %c0_77 = arith.constant 0 : index
    %c0_78 = arith.constant 0 : index
    %c0_79 = arith.constant 0 : index
    %108 = vector.load %arg10[%c0_77, %c0_78, %c0_79] : memref<1x16x256xf32, #tpu.memory_space<vmem>>, vector<1x16x256xf32>
    %109 = vector.shape_cast %108 : vector<1x16x256xf32> to vector<16x256xf32>
    %110 = vector.shape_cast %107 : vector<16x256xf32> to vector<1x16x256xf32>
    tpu.vector_store %arg10[%c0_77, %c0_78, %c0_79], %110 {strides = array<i32>} : memref<1x16x256xf32, #tpu.memory_space<vmem>>, vector<1x16x256xf32>,
    return
  }
  func.func @transform_0(%arg0: i32) -> (i32, i32, i32) {
    %c0_i32 = arith.constant 0 : i32
    %c0_i32_0 = arith.constant 0 : i32
    %c0_i32_1 = arith.constant 0 : i32
    return %arg0, %c0_i32, %c0_i32_0 : i32, i32, i32
  }
  func.func @transform_1(%arg0: i32) -> (i32, i32, i32) {
    %c0_i32 = arith.constant 0 : i32
    %c0_i32_0 = arith.constant 0 : i32
    %c0_i32_1 = arith.constant 0 : i32
    return %arg0, %c0_i32, %c0_i32_0 : i32, i32, i32
  }
  func.func @transform_2(%arg0: i32) -> (i32, i32) {
    %c0_i32 = arith.constant 0 : i32
    %c0_i32_0 = arith.constant 0 : i32
    %c0_i32_1 = arith.constant 0 : i32
    return %c0_i32, %c0_i32_0 : i32, i32
  }
  func.func @transform_3(%arg0: i32) -> (i32, i32) {
    %c0_i32 = arith.constant 0 : i32
    %c0_i32_0 = arith.constant 0 : i32
    %c0_i32_1 = arith.constant 0 : i32
    return %c0_i32, %c0_i32_0 : i32, i32
  }
  func.func @transform_4(%arg0: i32) -> (i32, i32) {
    %c0_i32 = arith.constant 0 : i32
    %c0_i32_0 = arith.constant 0 : i32
    %c0_i32_1 = arith.constant 0 : i32
    return %c0_i32, %c0_i32_0 : i32, i32
  }
  func.func @transform_5(%arg0: i32) -> (i32, i32) {
    %c0_i32 = arith.constant 0 : i32
    %c0_i32_0 = arith.constant 0 : i32
    %c0_i32_1 = arith.constant 0 : i32
    return %c0_i32, %c0_i32_0 : i32, i32
  }
  func.func @transform_6(%arg0: i32) -> (i32, i32) {
    %c0_i32 = arith.constant 0 : i32
    %c0_i32_0 = arith.constant 0 : i32
    %c0_i32_1 = arith.constant 0 : i32
    return %c0_i32, %c0_i32_0 : i32, i32
  }
  func.func @transform_7(%arg0: i32) -> (i32, i32) {
    %c0_i32 = arith.constant 0 : i32
    %c0_i32_0 = arith.constant 0 : i32
    %c0_i32_1 = arith.constant 0 : i32
    return %c0_i32, %c0_i32_0 : i32, i32
  }
  func.func @transform_8(%arg0: i32) -> i32 {
    %c0_i32 = arith.constant 0 : i32
    %c0_i32_0 = arith.constant 0 : i32
    return %c0_i32 : i32
  }
  func.func @transform_9(%arg0: i32) -> (i32, i32, i32) {
    %c0_i32 = arith.constant 0 : i32
    %c0_i32_0 = arith.constant 0 : i32
    %c0_i32_1 = arith.constant 0 : i32
    return %arg0, %c0_i32, %c0_i32_0 : i32, i32, i32
  }
}

</mosaic_0001>

<llo_original>
// kernel: tpu_custom_call.1
$region0: #{tpu_custom_call.1}
  #allocation0 [shape = 'u32[]', space=smem, size = 0x4, offset = 0x4, fixed_abs, tag = 'smem constant byte address 0x4 - core index']
  #allocation1 [shape = 'u32[144,128]{1,0:T(1,128)}', space=vmem, size = 0x12000, scoped, tag = 'internal scratch']
  #allocation2 [shape = 'f32[16,1]{1,0:T(8,128)}', space=vmem, size = 0x2000, scoped, tag = 'scratch operand']
  #allocation3 [shape = 'f32[16,1]{1,0:T(8,128)}', space=vmem, size = 0x2000, scoped, tag = 'scratch operand']
  #allocation4 [shape = 'f32[1,256]{1,0:T(1,128)}', space=vmem, size = 0x400, scoped, tag = 'scratch operand']
  %s0 = inlined_call_operand.hbm [shape: f32[2,16,256], index: 0, kind: input, shape index: {}]
  %s1 = inlined_call_operand.hbm [shape: f32[2,16,256], index: 1, kind: input, shape index: {}]
  %s2 = inlined_call_operand.vmem [shape: f32[16,16], index: 2, kind: input, shape index: {}]
  %s3 = inlined_call_operand.vmem [shape: f32[16,16], index: 3, kind: input, shape index: {}]
  %s4 = inlined_call_operand.vmem [shape: f32[2,16], index: 4, kind: input, shape index: {}]
  %s5 = inlined_call_operand.vmem [shape: f32[16,2], index: 5, kind: input, shape index: {}]
  %s6 = inlined_call_operand.vmem [shape: f32[16,2], index: 6, kind: input, shape index: {}]
  %s7 = inlined_call_operand.vmem [shape: f32[1,16], index: 7, kind: input, shape index: {}]
  %s8 = inlined_call_operand.vmem [shape: f32[2], index: 8, kind: input, shape index: {}]
  %s9 = inlined_call_operand.hbm [shape: f32[2,16,256], index: 9, kind: output, shape index: {}]
  %s10 = sld [smem:[#allocation0]]
  $region81: #{tpu_custom_call.1} parent=0
    _
  %s12 = ssub.s32 1, %s10
  %s13 = scalar_select 0, %s12, %s10
  $region1: #{tpu_custom_call.1} parent=0
    #allocation5 [shape = 'u8[32768]{0}', space=vmem, size = 0x8000, scoped, tag = 'input window, operand 0']
    #allocation6 [shape = 's32[2]{0}', space=sflag, size = 0x8, scoped, tag = 'scoped memory for tpu_custom_call.1']
    #allocation7 [shape = 's32[2]{0}', space=sflag, size = 0x8, scoped, tag = 'scoped memory for tpu_custom_call.1']
    #allocation8 [shape = 's32[2]{0}', space=sflag, size = 0x8, scoped, tag = 'scoped memory for tpu_custom_call.1']
    #allocation9 [shape = 'u8[32768]{0}', space=vmem, size = 0x8000, scoped, tag = 'input window, operand 1']
    #allocation10 [shape = 's32[2]{0}', space=sflag, size = 0x8, scoped, tag = 'scoped memory for tpu_custom_call.1']
    #allocation11 [shape = 'u8[512]{0}', space=smem, size = 0x200, scoped, tag = 'input window, operand 8, single buffered']
    #allocation12 [shape = 'u8[32768]{0}', space=vmem, size = 0x8000, scoped, tag = 'output window, operand 0']
    %14 = vsyncpa [#allocation6], 0
    %s15 = scalar_lea.sflag [#allocation6], 1
    %16 = vsyncpa %s15, 0
    %17 = vsyncpa [#allocation10], 0
    %s18 = scalar_lea.sflag [#allocation10], 1
    %19 = vsyncpa %s18, 0
    %20 = vsyncpa [#allocation8], 0
    %21 = vsyncpa [#allocation7], 0
    %s22 = scalar_lea.sflag [#allocation7], 1
    %23 = vsyncpa %s22, 0
    loop: start=0, step=1, limit=4
    $region2: #{tpu_custom_call.1} parent=1 // loop_pre_header
      _
    $region3: #{tpu_custom_call.1} parent=1 // loop_header
      %s25 = sphi 0, %s29
      %p26 = scmp.ge.s32.totalorder %s25, 4
      %s35 = sphi 0, %s37
      %s38 = sphi 0, %s35
      %s39 = sphi 0, %s38
      %s55 = sphi 0, %s39
      %s61 = sphi 0, %s63
      %s64 = sphi 0, %s61
      %s65 = sphi 0, %s64
      %s81 = sphi 0, %s65
      %s85 = sphi 0, %s85
      %s87 = sphi 0, %s85
      %s88 = sphi 0, %s87
      %s102 = sphi 0, %s88
      %s106 = sphi 0, %s106
      %s108 = sphi 0, %s106
      %s109 = sphi 0, %s108
      %s123 = sphi 0, %s109
      %s127 = sphi 0, %s127
      %s129 = sphi 0, %s127
      %s130 = sphi 0, %s129
      %s144 = sphi 0, %s130
      %s148 = sphi 0, %s148
      %s150 = sphi 0, %s148
      %s151 = sphi 0, %s150
      %s165 = sphi 0, %s151
      %s169 = sphi 0, %s169
      %s171 = sphi 0, %s169
      %s172 = sphi 0, %s171
      %s186 = sphi 0, %s172
      %s190 = sphi 0, %s190
      %s192 = sphi 0, %s190
      %s193 = sphi 0, %s192
      %s207 = sphi 0, %s193
      %s211 = sphi 0, %s211
      %s213 = sphi 0, %s211
      %s214 = sphi 0, %s213
      %s228 = sphi 0, %s214
      %s234 = sphi 0, %s236
      %s237 = sphi 0, %s234
      %s238 = sphi 0, %s237
      %s254 = sphi 0, %s238
    $region4: #{tpu_custom_call.1} parent=1 // loop_header_branch
      %28 = sbr.rel (%p26) target = $region8
    $region5: #{tpu_custom_call.1} parent=1 // loop_body
      %s30 = ssub.s32 %s25, 1
      %s31 = ssub.s32 %s25, 2
      %s32 = sadd.s32 %s25, 1
      %s33 = ssub.s32 %s25, %s32
      %p34 = scmp.eq.s32.totalorder %s33, 0
      %s36 = sadd.s32 %s35, 1
      %s37 = scalar_select %p34, %s35, %s36
      %p40 = pneg %p34
      %p41 = scmp.eq.s32.totalorder %s25, 1
      %p42 = por %p40, %p41
      %p43 = scmp.ne.s32.totalorder %s35, %s38
      %p44 = scmp.eq.s32.totalorder %s25, 0
      %p45 = por %p43, %p44
      %p46 = scmp.ne.s32.totalorder %s35, %s38
      %p47 = scmp.eq.s32.totalorder %s30, 1
      %p48 = por %p46, %p47
      %p49 = scmp.ne.s32.totalorder %s38, %s39
      %p50 = scmp.eq.s32.totalorder %s30, 0
      %p51 = por %p49, %p50
      %p52 = scmp.ne.s32.totalorder %s38, %s39
      %p53 = scmp.eq.s32.totalorder %s31, 1
      %p54 = por %p52, %p53
      %p56 = scmp.ne.s32.totalorder %s39, %s55
      %p57 = scmp.eq.s32.totalorder %s31, 0
      %p58 = por %p56, %p57
      %s59 = ssub.s32 %s25, %s32
      %p60 = scmp.eq.s32.totalorder %s59, 0
      %s62 = sadd.s32 %s61, 1
      %s63 = scalar_select %p60, %s61, %s62
      %p66 = pneg %p60
      %p67 = scmp.eq.s32.totalorder %s25, 1
      %p68 = por %p66, %p67
      %p69 = scmp.ne.s32.totalorder %s61, %s64
      %p70 = scmp.eq.s32.totalorder %s25, 0
      %p71 = por %p69, %p70
      %p72 = scmp.ne.s32.totalorder %s61, %s64
      %p73 = scmp.eq.s32.totalorder %s30, 1
      %p74 = por %p72, %p73
      %p75 = scmp.ne.s32.totalorder %s64, %s65
      %p76 = scmp.eq.s32.totalorder %s30, 0
      %p77 = por %p75, %p76
      %p78 = scmp.ne.s32.totalorder %s64, %s65
      %p79 = scmp.eq.s32.totalorder %s31, 1
      %p80 = por %p78, %p79
      %p82 = scmp.ne.s32.totalorder %s65, %s81
      %p83 = scmp.eq.s32.totalorder %s31, 0
      %p84 = por %p82, %p83
      %s86 = sadd.s32 %s85, 1
      %p89 = scmp.eq.s32.totalorder %s25, 1
      %p90 = scmp.ne.s32.totalorder %s85, %s87
      %p91 = scmp.eq.s32.totalorder %s25, 0
      %p92 = por %p90, %p91
      %p93 = scmp.ne.s32.totalorder %s85, %s87
      %p94 = scmp.eq.s32.totalorder %s30, 1
      %p95 = por %p93, %p94
      %p96 = scmp.ne.s32.totalorder %s87, %s88
      %p97 = scmp.eq.s32.totalorder %s30, 0
      %p98 = por %p96, %p97
      %p99 = scmp.ne.s32.totalorder %s87, %s88
      %p100 = scmp.eq.s32.totalorder %s31, 1
      %p101 = por %p99, %p100
      %p103 = scmp.ne.s32.totalorder %s88, %s102
      %p104 = scmp.eq.s32.totalorder %s31, 0
      %p105 = por %p103, %p104
      %s107 = sadd.s32 %s106, 1
      %p110 = scmp.eq.s32.totalorder %s25, 1
      %p111 = scmp.ne.s32.totalorder %s106, %s108
      %p112 = scmp.eq.s32.totalorder %s25, 0
      %p113 = por %p111, %p112
      %p114 = scmp.ne.s32.totalorder %s106, %s108
      %p115 = scmp.eq.s32.totalorder %s30, 1
      %p116 = por %p114, %p115
      %p117 = scmp.ne.s32.totalorder %s108, %s109
      %p118 = scmp.eq.s32.totalorder %s30, 0
      %p119 = por %p117, %p118
      %p120 = scmp.ne.s32.totalorder %s108, %s109
      %p121 = scmp.eq.s32.totalorder %s31, 1
      %p122 = por %p120, %p121
      %p124 = scmp.ne.s32.totalorder %s109, %s123
      %p125 = scmp.eq.s32.totalorder %s31, 0
      %p126 = por %p124, %p125
      %s128 = sadd.s32 %s127, 1
      %p131 = scmp.eq.s32.totalorder %s25, 1
      %p132 = scmp.ne.s32.totalorder %s127, %s129
      %p133 = scmp.eq.s32.totalorder %s25, 0
      %p134 = por %p132, %p133
      %p135 = scmp.ne.s32.totalorder %s127, %s129
      %p136 = scmp.eq.s32.totalorder %s30, 1
      %p137 = por %p135, %p136
      %p138 = scmp.ne.s32.totalorder %s129, %s130
      %p139 = scmp.eq.s32.totalorder %s30, 0
      %p140 = por %p138, %p139
      %p141 = scmp.ne.s32.totalorder %s129, %s130
      %p142 = scmp.eq.s32.totalorder %s31, 1
      %p143 = por %p141, %p142
      %p145 = scmp.ne.s32.totalorder %s130, %s144
      %p146 = scmp.eq.s32.totalorder %s31, 0
      %p147 = por %p145, %p146
      %s149 = sadd.s32 %s148, 1
      %p152 = scmp.eq.s32.totalorder %s25, 1
      %p153 = scmp.ne.s32.totalorder %s148, %s150
      %p154 = scmp.eq.s32.totalorder %s25, 0
      %p155 = por %p153, %p154
      %p156 = scmp.ne.s32.totalorder %s148, %s150
      %p157 = scmp.eq.s32.totalorder %s30, 1
      %p158 = por %p156, %p157
      %p159 = scmp.ne.s32.totalorder %s150, %s151
      %p160 = scmp.eq.s32.totalorder %s30, 0
      %p161 = por %p159, %p160
      %p162 = scmp.ne.s32.totalorder %s150, %s151
      %p163 = scmp.eq.s32.totalorder %s31, 1
      %p164 = por %p162, %p163
      %p166 = scmp.ne.s32.totalorder %s151, %s165
      %p167 = scmp.eq.s32.totalorder %s31, 0
      %p168 = por %p166, %p167
      %s170 = sadd.s32 %s169, 1
      %p173 = scmp.eq.s32.totalorder %s25, 1
      %p174 = scmp.ne.s32.totalorder %s169, %s171
      %p175 = scmp.eq.s32.totalorder %s25, 0
      %p176 = por %p174, %p175
      %p177 = scmp.ne.s32.totalorder %s169, %s171
      %p178 = scmp.eq.s32.totalorder %s30, 1
      %p179 = por %p177, %p178
      %p180 = scmp.ne.s32.totalorder %s171, %s172
      %p181 = scmp.eq.s32.totalorder %s30, 0
      %p182 = por %p180, %p181
      %p183 = scmp.ne.s32.totalorder %s171, %s172
      %p184 = scmp.eq.s32.totalorder %s31, 1
      %p185 = por %p183, %p184
      %p187 = scmp.ne.s32.totalorder %s172, %s186
      %p188 = scmp.eq.s32.totalorder %s31, 0
      %p189 = por %p187, %p188
      %s191 = sadd.s32 %s190, 1
      %p194 = scmp.eq.s32.totalorder %s25, 1
      %p195 = scmp.ne.s32.totalorder %s190, %s192
      %p196 = scmp.eq.s32.totalorder %s25, 0
      %p197 = por %p195, %p196
      %p198 = scmp.ne.s32.totalorder %s190, %s192
      %p199 = scmp.eq.s32.totalorder %s30, 1
      %p200 = por %p198, %p199
      %p201 = scmp.ne.s32.totalorder %s192, %s193
      %p202 = scmp.eq.s32.totalorder %s30, 0
      %p203 = por %p201, %p202
      %p204 = scmp.ne.s32.totalorder %s192, %s193
      %p205 = scmp.eq.s32.totalorder %s31, 1
      %p206 = por %p204, %p205
      %p208 = scmp.ne.s32.totalorder %s193, %s207
      %p209 = scmp.eq.s32.totalorder %s31, 0
      %p210 = por %p208, %p209
      %s212 = sadd.s32 %s211, 1
      %p215 = scmp.eq.s32.totalorder %s25, 1
      %p216 = scmp.ne.s32.totalorder %s211, %s213
      %p217 = scmp.eq.s32.totalorder %s25, 0
      %p218 = por %p216, %p217
      %p219 = scmp.ne.s32.totalorder %s211, %s213
      %p220 = scmp.eq.s32.totalorder %s30, 1
      %p221 = por %p219, %p220
      %p222 = scmp.ne.s32.totalorder %s213, %s214
      %p223 = scmp.eq.s32.totalorder %s30, 0
      %p224 = por %p222, %p223
      %p225 = scmp.ne.s32.totalorder %s213, %s214
      %p226 = scmp.eq.s32.totalorder %s31, 1
      %p227 = por %p225, %p226
      %p229 = scmp.ne.s32.totalorder %s214, %s228
      %p230 = scmp.eq.s32.totalorder %s31, 0
      %p231 = por %p229, %p230
      %s232 = ssub.s32 %s25, %s32
      %p233 = scmp.eq.s32.totalorder %s232, 0
      %s235 = sadd.s32 %s234, 1
      %s236 = scalar_select %p233, %s234, %s235
      %p239 = pneg %p233
      %p240 = scmp.eq.s32.totalorder %s25, 1
      %p241 = por %p239, %p240
      %p242 = scmp.ne.s32.totalorder %s234, %s237
      %p243 = scmp.eq.s32.totalorder %s25, 0
      %p244 = por %p242, %p243
      %p245 = scmp.ne.s32.totalorder %s234, %s237
      %p246 = scmp.eq.s32.totalorder %s30, 1
      %p247 = por %p245, %p246
      %p248 = scmp.ne.s32.totalorder %s237, %s238
      %p249 = scmp.eq.s32.totalorder %s30, 0
      %p250 = por %p248, %p249
      %p251 = scmp.ne.s32.totalorder %s237, %s238
      %p252 = scmp.eq.s32.totalorder %s31, 1
      %p253 = por %p251, %p252
      %p255 = scmp.ne.s32.totalorder %s238, %s254
      %p256 = scmp.eq.s32.totalorder %s31, 0
      %p257 = por %p255, %p256
      %p258 = scmp.le.s32.totalorder 1, %s25
      %p259 = scmp.lt.s32.totalorder %s25, 3
      %p260 = pnand %p258, %p259
      %p261 = pneg %p260
      // Predicated region
      $region9: #{tpu_custom_call.1} parent=5 // pred_check
        _
      $region10: #{tpu_custom_call.1} parent=5 // pred_check_branch
        %263 = sbr.rel (%p260) target = $region12
      $region11: #{tpu_custom_call.1} parent=5 // pred_region
        %s264 = ssub.s32 %s25, 1
        // Predicated region
        $region13: #{tpu_custom_call.1} parent=11 // pred_check
          %p265 = pneg %p98
        $region14: #{tpu_custom_call.1} parent=11 // pred_check_branch
          %267 = sbr.rel (%p265) target = $region16
        $region15: #{tpu_custom_call.1} parent=11 // pred_region
          _
        $region16: #{tpu_custom_call.1} parent=11 // pred_fallthru
          _
        // Predicated region
        $region17: #{tpu_custom_call.1} parent=11 // pred_check
          %p268 = pneg %p119
        $region18: #{tpu_custom_call.1} parent=11 // pred_check_branch
          %270 = sbr.rel (%p268) target = $region20
        $region19: #{tpu_custom_call.1} parent=11 // pred_region
          _
        $region20: #{tpu_custom_call.1} parent=11 // pred_fallthru
          _
        // Predicated region
        $region21: #{tpu_custom_call.1} parent=11 // pred_check
          %p271 = pneg %p140
        $region22: #{tpu_custom_call.1} parent=11 // pred_check_branch
          %273 = sbr.rel (%p271) target = $region24
        $region23: #{tpu_custom_call.1} parent=11 // pred_region
          _
        $region24: #{tpu_custom_call.1} parent=11 // pred_fallthru
          _
        // Predicated region
        $region25: #{tpu_custom_call.1} parent=11 // pred_check
          %p274 = pneg %p161
        $region26: #{tpu_custom_call.1} parent=11 // pred_check_branch
          %276 = sbr.rel (%p274) target = $region28
        $region27: #{tpu_custom_call.1} parent=11 // pred_region
          _
        $region28: #{tpu_custom_call.1} parent=11 // pred_fallthru
          _
        // Predicated region
        $region29: #{tpu_custom_call.1} parent=11 // pred_check
          %p277 = pneg %p182
        $region30: #{tpu_custom_call.1} parent=11 // pred_check_branch
          %279 = sbr.rel (%p277) target = $region32
        $region31: #{tpu_custom_call.1} parent=11 // pred_region
          _
        $region32: #{tpu_custom_call.1} parent=11 // pred_fallthru
          _
        // Predicated region
        $region33: #{tpu_custom_call.1} parent=11 // pred_check
          %p280 = pneg %p203
        $region34: #{tpu_custom_call.1} parent=11 // pred_check_branch
          %282 = sbr.rel (%p280) target = $region36
        $region35: #{tpu_custom_call.1} parent=11 // pred_region
          _
        $region36: #{tpu_custom_call.1} parent=11 // pred_fallthru
          _
        // Predicated region
        $region37: #{tpu_custom_call.1} parent=11 // pred_check
          %p283 = pneg %p224
        $region38: #{tpu_custom_call.1} parent=11 // pred_check_branch
          %285 = sbr.rel (%p283) target = $region40
        $region39: #{tpu_custom_call.1} parent=11 // pred_region
          %s287 = ssub.s32 16, 16
          %288 = vsyncadd [#allocation8], %s287
          %s290 = sshll.u32 %s8, 4
          %s291 = int_to_ptr.vmem [resolvable:$true] %s290
          %293 = dma.vmem_to_smem %s291, 16, [#allocation11], [#allocation8]
        $region40: #{tpu_custom_call.1} parent=11 // pred_fallthru
          _
      $region12: #{tpu_custom_call.1} parent=5 // pred_fallthru
        _
      %p294 = scmp.lt.s32.totalorder %s25, 2
      // Predicated region
      $region41: #{tpu_custom_call.1} parent=5 // pred_check
        %p295 = pneg %p294
      $region42: #{tpu_custom_call.1} parent=5 // pred_check_branch
        %297 = sbr.rel (%p295) target = $region44
      $region43: #{tpu_custom_call.1} parent=5 // pred_region
        // Predicated region
        $region45: #{tpu_custom_call.1} parent=43 // pred_check
          %p298 = pneg %p45
        $region46: #{tpu_custom_call.1} parent=43 // pred_check_branch
          %300 = sbr.rel (%p298) target = $region48
        $region47: #{tpu_custom_call.1} parent=43 // pred_region
          %s301 = sand.u32 %s35, 1
          %s302 = scalar_lea.sflag [#allocation6], %s301
          %s303 = sand.u32 %s35, 1
          %s304 = smul.addr %s303, 32
          %s305 = scalar_lea.vmem [#allocation5], %s304
          %s307 = ssub.s32 512, 512
          %308 = vsyncadd %s302, %s307
          %s309 = smul.addr %s25, 4
          %s310 = smul.addr %s309, 128
          %s311 = scalar_lea.hbm %s0, %s310
          %s312 = sshll.u32 %s305, 4
          %s313 = int_to_ptr.vmem [resolvable:$true] %s312
          %318 = dma.hbm_to_vmem [thread:$0]  %s311, 512, %s313, %s302, 256, 256, 16
        $region48: #{tpu_custom_call.1} parent=43 // pred_fallthru
          _
        // Predicated region
        $region49: #{tpu_custom_call.1} parent=43 // pred_check
          %p319 = pneg %p71
        $region50: #{tpu_custom_call.1} parent=43 // pred_check_branch
          %321 = sbr.rel (%p319) target = $region52
        $region51: #{tpu_custom_call.1} parent=43 // pred_region
          %s322 = sand.u32 %s61, 1
          %s323 = scalar_lea.sflag [#allocation10], %s322
          %s324 = sand.u32 %s61, 1
          %s325 = smul.addr %s324, 32
          %s326 = scalar_lea.vmem [#allocation9], %s325
          %s328 = ssub.s32 512, 512
          %329 = vsyncadd %s323, %s328
          %s330 = smul.addr %s25, 4
          %s331 = smul.addr %s330, 128
          %s332 = scalar_lea.hbm %s1, %s331
          %s333 = sshll.u32 %s326, 4
          %s334 = int_to_ptr.vmem [resolvable:$true] %s333
          %339 = dma.hbm_to_vmem [thread:$0]  %s332, 512, %s334, %s323, 256, 256, 16
        $region52: #{tpu_custom_call.1} parent=43 // pred_fallthru
          _
      $region44: #{tpu_custom_call.1} parent=5 // pred_fallthru
        _
      %p340 = scmp.le.s32.totalorder 1, %s25
      %p341 = scmp.lt.s32.totalorder %s25, 3
      %p342 = pnand %p340, %p341
      %p343 = pneg %p342
      // Predicated region
      $region53: #{tpu_custom_call.1} parent=5 // pred_check
        _
      $region54: #{tpu_custom_call.1} parent=5 // pred_check_branch
        %345 = sbr.rel (%p342) target = $region56
      $region55: #{tpu_custom_call.1} parent=5 // pred_region
        %s346 = ssub.s32 %s25, 1
        %s347 = sand.u32 %s38, 1
        %s348 = scalar_lea.sflag [#allocation6], %s347
        %s349 = sand.u32 %s38, 1
        %s350 = smul.addr %s349, 32
        %s351 = scalar_lea.vmem [#allocation5], %s350
        // Predicated region
        $region57: #{tpu_custom_call.1} parent=55 // pred_check
          %p352 = pneg %p51
        $region58: #{tpu_custom_call.1} parent=55 // pred_check_branch
          %354 = sbr.rel (%p352) target = $region60
        $region59: #{tpu_custom_call.1} parent=55 // pred_region
          %355 = dma.done %s348, 512
        $region60: #{tpu_custom_call.1} parent=55 // pred_fallthru
          _
        %s356 = sand.u32 %s64, 1
        %s357 = scalar_lea.sflag [#allocation10], %s356
        %s358 = sand.u32 %s64, 1
        %s359 = smul.addr %s358, 32
        %s360 = scalar_lea.vmem [#allocation9], %s359
        // Predicated region
        $region61: #{tpu_custom_call.1} parent=55 // pred_check
          %p361 = pneg %p77
        $region62: #{tpu_custom_call.1} parent=55 // pred_check_branch
          %363 = sbr.rel (%p361) target = $region64
        $region63: #{tpu_custom_call.1} parent=55 // pred_region
          %364 = dma.done %s357, 512
        $region64: #{tpu_custom_call.1} parent=55 // pred_fallthru
          _
        // Predicated region
        $region65: #{tpu_custom_call.1} parent=55 // pred_check
          %p365 = pneg %p224
        $region66: #{tpu_custom_call.1} parent=55 // pred_check_branch
          %367 = sbr.rel (%p365) target = $region68
        $region67: #{tpu_custom_call.1} parent=55 // pred_region
          %368 = dma.done [#allocation8], 16
        $region68: #{tpu_custom_call.1} parent=55 // pred_fallthru
          _
        %369 = sfence
        %s370 = sand.u32 %s38, 1
        %s371 = scalar_lea.sflag [#allocation6], %s370
        %s372 = sand.u32 %s38, 1
        %s373 = smul.addr %s372, 32
        %s374 = scalar_lea.vmem [#allocation5], %s373
        %p375 = pneg %p51
        %p376 = pneg %p48
        %s377 = sand.u32 %s64, 1
        %s378 = scalar_lea.sflag [#allocation10], %s377
        %s379 = sand.u32 %s64, 1
        %s380 = smul.addr %s379, 32
        %s381 = scalar_lea.vmem [#allocation9], %s380
        %p382 = pneg %p77
        %p383 = pneg %p74
        %p384 = pneg %p98
        %p385 = pneg %p95
        %p386 = pneg %p119
        %p387 = pneg %p116
        %p388 = pneg %p140
        %p389 = pneg %p137
        %p390 = pneg %p161
        %p391 = pneg %p158
        %p392 = pneg %p182
        %p393 = pneg %p179
        %p394 = pneg %p203
        %p395 = pneg %p200
        %p396 = pneg %p224
        %p397 = pneg %p221
        %p398 = pneg %p250
        %p399 = pneg %p247
        %s400 = sand.u32 %s237, 1
        %s401 = scalar_lea.sflag [#allocation7], %s400
        %s402 = sand.u32 %s237, 1
        %s403 = smul.addr %s402, 32
        %s404 = scalar_lea.vmem [#allocation12], %s403
        %vm405 = vcmask 7168
        %406 = vst.msk [vmem:[#allocation2] sm:$0xff] %vm405, 0.0
        %407 = vst.msk [vmem:[#allocation2 + $0x8] sm:$0xff] %vm405, 0.0
        %408 = vst.msk [vmem:[#allocation3] sm:$0xff] %vm405, 0.0
        %409 = vst.msk [vmem:[#allocation3 + $0x8] sm:$0xff] %vm405, 0.0
        %v410 = vld [vmem:[%s351] sm:$0xff]
        %v411 = vld [vmem:[%s351 + $0x8] sm:$0xff]
        %v412 = vld [vmem:[%s351 + $0x10] sm:$0xff]
        %v413 = vld [vmem:[%s351 + $0x18] sm:$0xff]
        %v414 = vld [vmem:[%s360] sm:$0xff]
        %v415 = vld [vmem:[%s360 + $0x8] sm:$0xff]
        %v416 = vld [vmem:[%s360 + $0x10] sm:$0xff]
        %v417 = vld [vmem:[%s360 + $0x18] sm:$0xff]
        %v418 = vld [vmem:[%s2] sm:$0xff]
        %v419 = vld [vmem:[%s2 + $0x8] sm:$0xff]
        %v420 = vld [vmem:[%s3] sm:$0xff]
        %v421 = vld [vmem:[%s3 + $0x8] sm:$0xff]
        %vm422 = vcmask 130048
        %v424 = vsel %vm422, %v420, 0
        %v427 = vsel %vm422, %v421, 0
        %429 = vmatprep.subr.mxu0 0.0
        %430 = vmatpush1.msra.mxu0 0.0
        %431 = vmatprep.subr.mxu0 0.0
        %432 = vmatpush1.msra.mxu0 0.0
        %433 = vmatprep.subr.mxu0 0.0
        %434 = vmatpush1.msra.mxu0 0.0
        %435 = vmatprep.subr.mxu0 0.0
        %436 = vmatpush1.msra.mxu0 0.0
        %437 = vmatprep.subr.mxu0 0.0
        %438 = vmatpush1.msra.mxu0 0.0
        %439 = vmatprep.subr.mxu0 0.0
        %440 = vmatpush1.msra.mxu0 0.0
        %441 = vmatprep.subr.mxu0 0.0
        %442 = vmatpush1.msra.mxu0 0.0
        %443 = vmatprep.subr.mxu0 0.0
        %444 = vmatpush1.msra.mxu0 0.0
        %445 = vmatprep.subr.mxu0 0.0
        %446 = vmatpush1.msra.mxu0 0.0
        %447 = vmatprep.subr.mxu0 0.0
        %448 = vmatpush1.msra.mxu0 0.0
        %449 = vmatprep.subr.mxu0 0.0
        %450 = vmatpush1.msra.mxu0 0.0
        %451 = vmatprep.subr.mxu0 0.0
        %452 = vmatpush1.msra.mxu0 0.0
        %453 = vmatprep.subr.mxu0 0.0
        %454 = vmatpush1.msra.mxu0 0.0
        %455 = vmatprep.subr.mxu0 0.0
        %456 = vmatpush1.msra.mxu0 0.0
        %457 = vmatprep.subr.mxu0 %v417
        %458 = vmatpush1.msra.mxu0 %v416
        %459 = vmatprep.subr.mxu0 %v415
        %460 = vmatpush1.msra.mxu0 %v414
        %461 = vmatprep.subr.mxu0 0.0
        %462 = vmatpush2.msra.mxu0 0.0
        %463 = vmatprep.subr.mxu0 0.0
        %464 = vmatpush2.msra.mxu0 0.0
        %465 = vmatprep.subr.mxu0 0.0
        %466 = vmatpush2.msra.mxu0 0.0
        %467 = vmatprep.subr.mxu0 0.0
        %468 = vmatpush2.msra.mxu0 0.0
        %469 = vmatprep.subr.mxu0 0.0
        %470 = vmatpush2.msra.mxu0 0.0
        %471 = vmatprep.subr.mxu0 0.0
        %472 = vmatpush2.msra.mxu0 0.0
        %473 = vmatprep.subr.mxu0 0.0
        %474 = vmatpush2.msra.mxu0 0.0
        %475 = vmatprep.subr.mxu0 0.0
        %476 = vmatpush2.msra.mxu0 0.0
        %477 = vmatprep.subr.mxu0 0.0
        %478 = vmatpush2.msra.mxu0 0.0
        %479 = vmatprep.subr.mxu0 0.0
        %480 = vmatpush2.msra.mxu0 0.0
        %481 = vmatprep.subr.mxu0 0.0
        %482 = vmatpush2.msra.mxu0 0.0
        %483 = vmatprep.subr.mxu0 0.0
        %484 = vmatpush2.msra.mxu0 0.0
        %485 = vmatprep.subr.mxu0 0.0
        %486 = vmatpush2.msra.mxu0 0.0
        %487 = vmatprep.subr.mxu0 0.0
        %488 = vmatpush2.msra.mxu0 0.0
        %489 = vmatprep.subr.mxu0 0.0
        %490 = vmatpush2.msra.mxu0 0.0
        %491 = vmatprep.subr.mxu0 0.0
        %492 = vmatpush2.msra.mxu0 0.0
        %493 = vmatprep.mubr.f32.mxu0 0.0
        %494 = vmatmul.mubr.f32.gmra.mxu0 %v424
        %v495 = vpop.f32.mrf.mxu0
        %v496 = vadd.f32 0.0, %v495
        %v497 = vpop.f32.mrf.mxu0
        %v498 = vadd.f32 0.0, %v497
        %499 = vmatprep.mubr.f32.mxu0 0.0
        %500 = vmatmul.mubr.f32.gmra.mxu0 %v427
        %v501 = vpop.f32.mrf.mxu0
        %v502 = vadd.f32 0.0, %v501
        %v503 = vpop.f32.mrf.mxu0
        %v504 = vadd.f32 0.0, %v503
        %505 = vdwg.mxu0
        %v507 = vsel %vm422, %v418, 0
        %v510 = vsel %vm422, %v419, 0
        %512 = vmatprep.subr.mxu0 0.0
        %513 = vmatpush1.msra.mxu0 0.0
        %514 = vmatprep.subr.mxu0 0.0
        %515 = vmatpush1.msra.mxu0 0.0
        %516 = vmatprep.subr.mxu0 0.0
        %517 = vmatpush1.msra.mxu0 0.0
        %518 = vmatprep.subr.mxu0 0.0
        %519 = vmatpush1.msra.mxu0 0.0
        %520 = vmatprep.subr.mxu0 0.0
        %521 = vmatpush1.msra.mxu0 0.0
        %522 = vmatprep.subr.mxu0 0.0
        %523 = vmatpush1.msra.mxu0 0.0
        %524 = vmatprep.subr.mxu0 0.0
        %525 = vmatpush1.msra.mxu0 0.0
        %526 = vmatprep.subr.mxu0 0.0
        %527 = vmatpush1.msra.mxu0 0.0
        %528 = vmatprep.subr.mxu0 0.0
        %529 = vmatpush1.msra.mxu0 0.0
        %530 = vmatprep.subr.mxu0 0.0
        %531 = vmatpush1.msra.mxu0 0.0
        %532 = vmatprep.subr.mxu0 0.0
        %533 = vmatpush1.msra.mxu0 0.0
        %534 = vmatprep.subr.mxu0 0.0
        %535 = vmatpush1.msra.mxu0 0.0
        %536 = vmatprep.subr.mxu0 0.0
        %537 = vmatpush1.msra.mxu0 0.0
        %538 = vmatprep.subr.mxu0 0.0
        %539 = vmatpush1.msra.mxu0 0.0
        %540 = vmatprep.subr.mxu0 %v413
        %541 = vmatpush1.msra.mxu0 %v412
        %542 = vmatprep.subr.mxu0 %v411
        %543 = vmatpush1.msra.mxu0 %v410
        %544 = vmatprep.subr.mxu0 0.0
        %545 = vmatpush2.msra.mxu0 0.0
        %546 = vmatprep.subr.mxu0 0.0
        %547 = vmatpush2.msra.mxu0 0.0
        %548 = vmatprep.subr.mxu0 0.0
        %549 = vmatpush2.msra.mxu0 0.0
        %550 = vmatprep.subr.mxu0 0.0
        %551 = vmatpush2.msra.mxu0 0.0
        %552 = vmatprep.subr.mxu0 0.0
        %553 = vmatpush2.msra.mxu0 0.0
        %554 = vmatprep.subr.mxu0 0.0
        %555 = vmatpush2.msra.mxu0 0.0
        %556 = vmatprep.subr.mxu0 0.0
        %557 = vmatpush2.msra.mxu0 0.0
        %558 = vmatprep.subr.mxu0 0.0
        %559 = vmatpush2.msra.mxu0 0.0
        %560 = vmatprep.subr.mxu0 0.0
        %561 = vmatpush2.msra.mxu0 0.0
        %562 = vmatprep.subr.mxu0 0.0
        %563 = vmatpush2.msra.mxu0 0.0
        %564 = vmatprep.subr.mxu0 0.0
        %565 = vmatpush2.msra.mxu0 0.0
        %566 = vmatprep.subr.mxu0 0.0
        %567 = vmatpush2.msra.mxu0 0.0
        %568 = vmatprep.subr.mxu0 0.0
        %569 = vmatpush2.msra.mxu0 0.0
        %570 = vmatprep.subr.mxu0 0.0
        %571 = vmatpush2.msra.mxu0 0.0
        %572 = vmatprep.subr.mxu0 0.0
        %573 = vmatpush2.msra.mxu0 0.0
        %574 = vmatprep.subr.mxu0 0.0
        %575 = vmatpush2.msra.mxu0 0.0
        %576 = vmatprep.mubr.f32.mxu0 0.0
        %577 = vmatmul.mubr.f32.gmra.mxu0 %v507
        %v578 = vpop.f32.mrf.mxu0
        %v579 = vadd.f32 %v496, %v578
        %v580 = vpop.f32.mrf.mxu0
        %v581 = vadd.f32 %v498, %v580
        %582 = vmatprep.mubr.f32.mxu0 0.0
        %583 = vmatmul.mubr.f32.gmra.mxu0 %v510
        %v584 = vpop.f32.mrf.mxu0
        %v585 = vadd.f32 %v502, %v584
        %v586 = vpop.f32.mrf.mxu0
        %v587 = vadd.f32 %v504, %v586
        %588 = vdwg.mxu0
        %v589 = vld [vmem:[#allocation2] sm:$0xff]
        %v590 = vld [vmem:[#allocation2 + $0x8] sm:$0xff]
        %v591 = vadd.f32 %v579, %v581
        %592 = vadd.xlane.f32.xlu0 %v591
        %v593 = vpop.xlane.xlu0 %592
        %v594 = vadd.f32 %v585, %v587
        %595 = vadd.xlane.f32.xlu0 %v594
        %v596 = vpop.xlane.xlu0 %595
        %v597 = vadd.f32 %v589, %v593
        %v598 = vadd.f32 %v590, %v596
        %599 = vst.msk [vmem:[#allocation2] sm:$0xff] %vm405, %v597
        %600 = vst.msk [vmem:[#allocation2 + $0x8] sm:$0xff] %vm405, %v598
        %v601 = vld [vmem:[#allocation3] sm:$0xff]
        %v602 = vld [vmem:[#allocation3 + $0x8] sm:$0xff]
        %v603 = vmul.f32 %v579, %v579
        %v604 = vmul.f32 %v581, %v581
        %v605 = vmul.f32 %v585, %v585
        %v606 = vmul.f32 %v587, %v587
        %v607 = vadd.f32 %v603, %v604
        %608 = vadd.xlane.f32.xlu0 %v607
        %v609 = vpop.xlane.xlu0 %608
        %v610 = vadd.f32 %v605, %v606
        %611 = vadd.xlane.f32.xlu0 %v610
        %v612 = vpop.xlane.xlu0 %611
        %v613 = vadd.f32 %v601, %v609
        %v614 = vadd.f32 %v602, %v612
        %615 = vst.msk [vmem:[#allocation3] sm:$0xff] %vm405, %v613
        %616 = vst.msk [vmem:[#allocation3 + $0x8] sm:$0xff] %vm405, %v614
        %v617 = vld [vmem:[#allocation2] sm:$0xff]
        %v618 = vld [vmem:[#allocation2 + $0x8] sm:$0xff]
        %v619 = vld [vmem:[#allocation3] sm:$0xff]
        %v620 = vld [vmem:[#allocation3 + $0x8] sm:$0xff]
        %623 = vrot.lane.b32.xlu0 %v619, 1
        %v624 = vpop.permute.xlu0 %623
        %625 = vrot.lane.b32.xlu0 %v620, 1
        %v626 = vpop.permute.xlu0 %625
        %v629 = vsel %vm405, %v617, %v624
        %v630 = vsel %vm405, %v618, %v626
        %v631 = vld [vmem:[%s4] sm:$0x3]
        %v633 = vsel %vm422, %v631, 0
        %635 = vmatprep.subr.mxu0 0.0
        %636 = vmatpush1.msra.mxu0 0.0
        %637 = vmatprep.subr.mxu0 0.0
        %638 = vmatpush1.msra.mxu0 0.0
        %639 = vmatprep.subr.mxu0 0.0
        %640 = vmatpush1.msra.mxu0 0.0
        %641 = vmatprep.subr.mxu0 0.0
        %642 = vmatpush1.msra.mxu0 0.0
        %643 = vmatprep.subr.mxu0 0.0
        %644 = vmatpush1.msra.mxu0 0.0
        %645 = vmatprep.subr.mxu0 0.0
        %646 = vmatpush1.msra.mxu0 0.0
        %647 = vmatprep.subr.mxu0 0.0
        %648 = vmatpush1.msra.mxu0 0.0
        %649 = vmatprep.subr.mxu0 0.0
        %650 = vmatpush1.msra.mxu0 0.0
        %651 = vmatprep.subr.mxu0 0.0
        %652 = vmatpush1.msra.mxu0 0.0
        %653 = vmatprep.subr.mxu0 0.0
        %654 = vmatpush1.msra.mxu0 0.0
        %655 = vmatprep.subr.mxu0 0.0
        %656 = vmatpush1.msra.mxu0 0.0
        %657 = vmatprep.subr.mxu0 0.0
        %658 = vmatpush1.msra.mxu0 0.0
        %659 = vmatprep.subr.mxu0 0.0
        %660 = vmatpush1.msra.mxu0 0.0
        %661 = vmatprep.subr.mxu0 0.0
        %662 = vmatpush1.msra.mxu0 0.0
        %663 = vmatprep.subr.mxu0 0.0
        %664 = vmatpush1.msra.mxu0 %v630
        %665 = vmatprep.subr.mxu0 0.0
        %666 = vmatpush1.msra.mxu0 %v629
        %667 = vmatprep.subr.mxu0 0.0
        %668 = vmatpush2.msra.mxu0 0.0
        %669 = vmatprep.subr.mxu0 0.0
        %670 = vmatpush2.msra.mxu0 0.0
        %671 = vmatprep.subr.mxu0 0.0
        %672 = vmatpush2.msra.mxu0 0.0
        %673 = vmatprep.subr.mxu0 0.0
        %674 = vmatpush2.msra.mxu0 0.0
        %675 = vmatprep.subr.mxu0 0.0
        %676 = vmatpush2.msra.mxu0 0.0
        %677 = vmatprep.subr.mxu0 0.0
        %678 = vmatpush2.msra.mxu0 0.0
        %679 = vmatprep.subr.mxu0 0.0
        %680 = vmatpush2.msra.mxu0 0.0
        %681 = vmatprep.subr.mxu0 0.0
        %682 = vmatpush2.msra.mxu0 0.0
        %683 = vmatprep.subr.mxu0 0.0
        %684 = vmatpush2.msra.mxu0 0.0
        %685 = vmatprep.subr.mxu0 0.0
        %686 = vmatpush2.msra.mxu0 0.0
        %687 = vmatprep.subr.mxu0 0.0
        %688 = vmatpush2.msra.mxu0 0.0
        %689 = vmatprep.subr.mxu0 0.0
        %690 = vmatpush2.msra.mxu0 0.0
        %691 = vmatprep.subr.mxu0 0.0
        %692 = vmatpush2.msra.mxu0 0.0
        %693 = vmatprep.subr.mxu0 0.0
        %694 = vmatpush2.msra.mxu0 0.0
        %695 = vmatprep.subr.mxu0 0.0
        %696 = vmatpush2.msra.mxu0 0.0
        %697 = vmatprep.subr.mxu0 0.0
        %698 = vmatpush2.msra.mxu0 0.0
        %699 = vmatprep.mubr.f32.mxu0 0.0
        %700 = vmatmul.mubr.f32.gmra.mxu0 %v633
        %v701 = vpop.f32.mrf.mxu0
        %v702 = vadd.f32 0.0, %v701
        %v703 = vpop.f32.mrf.mxu0
        %704 = vdwg.mxu0
        %v705 = vmul.f32 %v702, 0.00048828125
        %v706 = vmul.f32 %v705, %v705
        %708 = vrot.lane.b32.xlu0 %v706, 1
        %v709 = vpop.permute.xlu0 %708
        %v711 = vsub.f32 %v705, %v709
        %v712 = vmax.f32 %v711, 0.0
        %v713 = vadd.f32 %v712, 1e-05
        %v714 = vrsqrt.pop %v713
        %v715 = vld [vmem:[%s5] sm:$0xff]
        %v716 = vld [vmem:[%s5 + $0x8] sm:$0xff]
        %v717 = vsel %vm405, %v705, %v714
        %vm718 = vcmask 15360
        %v720 = vsel %vm718, %v715, 0
        %v723 = vsel %vm718, %v716, 0
        %vm725 = vcmask 1041408
        %v727 = vsel %vm725, %v717, 0
        %729 = vmatprep.subr.mxu0 0.0
        %730 = vmatpush1.msra.mxu0 0.0
        %731 = vmatprep.subr.mxu0 0.0
        %732 = vmatpush1.msra.mxu0 0.0
        %733 = vmatprep.subr.mxu0 0.0
        %734 = vmatpush1.msra.mxu0 0.0
        %735 = vmatprep.subr.mxu0 0.0
        %736 = vmatpush1.msra.mxu0 0.0
        %737 = vmatprep.subr.mxu0 0.0
        %738 = vmatpush1.msra.mxu0 0.0
        %739 = vmatprep.subr.mxu0 0.0
        %740 = vmatpush1.msra.mxu0 0.0
        %741 = vmatprep.subr.mxu0 0.0
        %742 = vmatpush1.msra.mxu0 0.0
        %743 = vmatprep.subr.mxu0 0.0
        %744 = vmatpush1.msra.mxu0 0.0
        %745 = vmatprep.subr.mxu0 0.0
        %746 = vmatpush1.msra.mxu0 0.0
        %747 = vmatprep.subr.mxu0 0.0
        %748 = vmatpush1.msra.mxu0 0.0
        %749 = vmatprep.subr.mxu0 0.0
        %750 = vmatpush1.msra.mxu0 0.0
        %751 = vmatprep.subr.mxu0 0.0
        %752 = vmatpush1.msra.mxu0 0.0
        %753 = vmatprep.subr.mxu0 0.0
        %754 = vmatpush1.msra.mxu0 0.0
        %755 = vmatprep.subr.mxu0 0.0
        %756 = vmatpush1.msra.mxu0 0.0
        %757 = vmatprep.subr.mxu0 0.0
        %758 = vmatpush1.msra.mxu0 0.0
        %759 = vmatprep.subr.mxu0 0.0
        %760 = vmatpush1.msra.mxu0 %v727
        %761 = vmatprep.subr.mxu0 0.0
        %762 = vmatpush2.msra.mxu0 0.0
        %763 = vmatprep.subr.mxu0 0.0
        %764 = vmatpush2.msra.mxu0 0.0
        %765 = vmatprep.subr.mxu0 0.0
        %766 = vmatpush2.msra.mxu0 0.0
        %767 = vmatprep.subr.mxu0 0.0
        %768 = vmatpush2.msra.mxu0 0.0
        %769 = vmatprep.subr.mxu0 0.0
        %770 = vmatpush2.msra.mxu0 0.0
        %771 = vmatprep.subr.mxu0 0.0
        %772 = vmatpush2.msra.mxu0 0.0
        %773 = vmatprep.subr.mxu0 0.0
        %774 = vmatpush2.msra.mxu0 0.0
        %775 = vmatprep.subr.mxu0 0.0
        %776 = vmatpush2.msra.mxu0 0.0
        %777 = vmatprep.subr.mxu0 0.0
        %778 = vmatpush2.msra.mxu0 0.0
        %779 = vmatprep.subr.mxu0 0.0
        %780 = vmatpush2.msra.mxu0 0.0
        %781 = vmatprep.subr.mxu0 0.0
        %782 = vmatpush2.msra.mxu0 0.0
        %783 = vmatprep.subr.mxu0 0.0
        %784 = vmatpush2.msra.mxu0 0.0
        %785 = vmatprep.subr.mxu0 0.0
        %786 = vmatpush2.msra.mxu0 0.0
        %787 = vmatprep.subr.mxu0 0.0
        %788 = vmatpush2.msra.mxu0 0.0
        %789 = vmatprep.subr.mxu0 0.0
        %790 = vmatpush2.msra.mxu0 0.0
        %791 = vmatprep.subr.mxu0 0.0
        %792 = vmatpush2.msra.mxu0 0.0
        %793 = vmatprep.mubr.f32.mxu0 0.0
        %794 = vmatmul.mubr.f32.gmra.mxu0 %v720
        %v795 = vpop.f32.mrf.mxu0
        %v796 = vadd.f32 0.0, %v795
        %v797 = vpop.f32.mrf.mxu0
        %798 = vmatprep.mubr.f32.mxu0 0.0
        %799 = vmatmul.mubr.f32.gmra.mxu0 %v723
        %v800 = vpop.f32.mrf.mxu0
        %v801 = vadd.f32 0.0, %v800
        %v802 = vpop.f32.mrf.mxu0
        %803 = vdwg.mxu0
        %v804 = vld [vmem:[%s6] sm:$0xff]
        %v805 = vld [vmem:[%s6 + $0x8] sm:$0xff]
        %808 = vrot.lane.b32.xlu0 %v804, 1
        %v809 = vpop.permute.xlu0 %808
        %810 = vrot.lane.b32.xlu0 %v805, 1
        %v811 = vpop.permute.xlu0 %810
        %v814 = vmul.f32 %v796, %v809
        %v815 = vmul.f32 %v801, %v811
        %818 = vrot.lane.b32.xlu0 %v814, 127
        %v819 = vpop.permute.xlu0 %818
        %820 = vrot.lane.b32.xlu0 %v815, 127
        %v821 = vpop.permute.xlu0 %820
        %v824 = vmul.f32 %v796, %v819
        %v825 = vmul.f32 %v801, %v821
        %828 = vrot.lane.b32.xlu0 %v824, 1
        %v829 = vpop.permute.xlu0 %828
        %830 = vrot.lane.b32.xlu0 %v825, 1
        %v831 = vpop.permute.xlu0 %830
        %v834 = vsub.f32 %v804, %v829
        %v835 = vsub.f32 %v805, %v831
        %v836 = vld [vmem:[%s7] sm:$0x1]
        %v837 = vld [vmem:[%s351] sm:$0xff]
        %v838 = vld [vmem:[%s351 + $0x8] sm:$0xff]
        %v839 = vld [vmem:[%s351 + $0x10] sm:$0xff]
        %v840 = vld [vmem:[%s351 + $0x18] sm:$0xff]
        %v841 = vld [vmem:[%s360] sm:$0xff]
        %v842 = vld [vmem:[%s360 + $0x8] sm:$0xff]
        %v843 = vld [vmem:[%s360 + $0x10] sm:$0xff]
        %v844 = vld [vmem:[%s360 + $0x18] sm:$0xff]
        %v845 = vld [vmem:[%s2] sm:$0xff]
        %v846 = vld [vmem:[%s2 + $0x8] sm:$0xff]
        %v847 = vld [vmem:[%s3] sm:$0xff]
        %v848 = vld [vmem:[%s3 + $0x8] sm:$0xff]
        %v850 = vsel %vm422, %v847, 0
        %v853 = vsel %vm422, %v848, 0
        %855 = vmatprep.subr.mxu0 0.0
        %856 = vmatpush1.msra.mxu0 0.0
        %857 = vmatprep.subr.mxu0 0.0
        %858 = vmatpush1.msra.mxu0 0.0
        %859 = vmatprep.subr.mxu0 0.0
        %860 = vmatpush1.msra.mxu0 0.0
        %861 = vmatprep.subr.mxu0 0.0
        %862 = vmatpush1.msra.mxu0 0.0
        %863 = vmatprep.subr.mxu0 0.0
        %864 = vmatpush1.msra.mxu0 0.0
        %865 = vmatprep.subr.mxu0 0.0
        %866 = vmatpush1.msra.mxu0 0.0
        %867 = vmatprep.subr.mxu0 0.0
        %868 = vmatpush1.msra.mxu0 0.0
        %869 = vmatprep.subr.mxu0 0.0
        %870 = vmatpush1.msra.mxu0 0.0
        %871 = vmatprep.subr.mxu0 0.0
        %872 = vmatpush1.msra.mxu0 0.0
        %873 = vmatprep.subr.mxu0 0.0
        %874 = vmatpush1.msra.mxu0 0.0
        %875 = vmatprep.subr.mxu0 0.0
        %876 = vmatpush1.msra.mxu0 0.0
        %877 = vmatprep.subr.mxu0 0.0
        %878 = vmatpush1.msra.mxu0 0.0
        %879 = vmatprep.subr.mxu0 0.0
        %880 = vmatpush1.msra.mxu0 0.0
        %881 = vmatprep.subr.mxu0 0.0
        %882 = vmatpush1.msra.mxu0 0.0
        %883 = vmatprep.subr.mxu0 %v844
        %884 = vmatpush1.msra.mxu0 %v843
        %885 = vmatprep.subr.mxu0 %v842
        %886 = vmatpush1.msra.mxu0 %v841
        %887 = vmatprep.subr.mxu0 0.0
        %888 = vmatpush2.msra.mxu0 0.0
        %889 = vmatprep.subr.mxu0 0.0
        %890 = vmatpush2.msra.mxu0 0.0
        %891 = vmatprep.subr.mxu0 0.0
        %892 = vmatpush2.msra.mxu0 0.0
        %893 = vmatprep.subr.mxu0 0.0
        %894 = vmatpush2.msra.mxu0 0.0
        %895 = vmatprep.subr.mxu0 0.0
        %896 = vmatpush2.msra.mxu0 0.0
        %897 = vmatprep.subr.mxu0 0.0
        %898 = vmatpush2.msra.mxu0 0.0
        %899 = vmatprep.subr.mxu0 0.0
        %900 = vmatpush2.msra.mxu0 0.0
        %901 = vmatprep.subr.mxu0 0.0
        %902 = vmatpush2.msra.mxu0 0.0
        %903 = vmatprep.subr.mxu0 0.0
        %904 = vmatpush2.msra.mxu0 0.0
        %905 = vmatprep.subr.mxu0 0.0
        %906 = vmatpush2.msra.mxu0 0.0
        %907 = vmatprep.subr.mxu0 0.0
        %908 = vmatpush2.msra.mxu0 0.0
        %909 = vmatprep.subr.mxu0 0.0
        %910 = vmatpush2.msra.mxu0 0.0
        %911 = vmatprep.subr.mxu0 0.0
        %912 = vmatpush2.msra.mxu0 0.0
        %913 = vmatprep.subr.mxu0 0.0
        %914 = vmatpush2.msra.mxu0 0.0
        %915 = vmatprep.subr.mxu0 0.0
        %916 = vmatpush2.msra.mxu0 0.0
        %917 = vmatprep.subr.mxu0 0.0
        %918 = vmatpush2.msra.mxu0 0.0
        %919 = vmatprep.mubr.f32.mxu0 0.0
        %920 = vmatmul.mubr.f32.gmra.mxu0 %v850
        %v921 = vpop.f32.mrf.mxu0
        %v922 = vadd.f32 0.0, %v921
        %v923 = vpop.f32.mrf.mxu0
        %v924 = vadd.f32 0.0, %v923
        %925 = vmatprep.mubr.f32.mxu0 0.0
        %926 = vmatmul.mubr.f32.gmra.mxu0 %v853
        %v927 = vpop.f32.mrf.mxu0
        %v928 = vadd.f32 0.0, %v927
        %v929 = vpop.f32.mrf.mxu0
        %v930 = vadd.f32 0.0, %v929
        %931 = vdwg.mxu0
        %v933 = vsel %vm422, %v845, 0
        %v936 = vsel %vm422, %v846, 0
        %938 = vmatprep.subr.mxu0 0.0
        %939 = vmatpush1.msra.mxu0 0.0
        %940 = vmatprep.subr.mxu0 0.0
        %941 = vmatpush1.msra.mxu0 0.0
        %942 = vmatprep.subr.mxu0 0.0
        %943 = vmatpush1.msra.mxu0 0.0
        %944 = vmatprep.subr.mxu0 0.0
        %945 = vmatpush1.msra.mxu0 0.0
        %946 = vmatprep.subr.mxu0 0.0
        %947 = vmatpush1.msra.mxu0 0.0
        %948 = vmatprep.subr.mxu0 0.0
        %949 = vmatpush1.msra.mxu0 0.0
        %950 = vmatprep.subr.mxu0 0.0
        %951 = vmatpush1.msra.mxu0 0.0
        %952 = vmatprep.subr.mxu0 0.0
        %953 = vmatpush1.msra.mxu0 0.0
        %954 = vmatprep.subr.mxu0 0.0
        %955 = vmatpush1.msra.mxu0 0.0
        %956 = vmatprep.subr.mxu0 0.0
        %957 = vmatpush1.msra.mxu0 0.0
        %958 = vmatprep.subr.mxu0 0.0
        %959 = vmatpush1.msra.mxu0 0.0
        %960 = vmatprep.subr.mxu0 0.0
        %961 = vmatpush1.msra.mxu0 0.0
        %962 = vmatprep.subr.mxu0 0.0
        %963 = vmatpush1.msra.mxu0 0.0
        %964 = vmatprep.subr.mxu0 0.0
        %965 = vmatpush1.msra.mxu0 0.0
        %966 = vmatprep.subr.mxu0 %v840
        %967 = vmatpush1.msra.mxu0 %v839
        %968 = vmatprep.subr.mxu0 %v838
        %969 = vmatpush1.msra.mxu0 %v837
        %970 = vmatprep.subr.mxu0 0.0
        %971 = vmatpush2.msra.mxu0 0.0
        %972 = vmatprep.subr.mxu0 0.0
        %973 = vmatpush2.msra.mxu0 0.0
        %974 = vmatprep.subr.mxu0 0.0
        %975 = vmatpush2.msra.mxu0 0.0
        %976 = vmatprep.subr.mxu0 0.0
        %977 = vmatpush2.msra.mxu0 0.0
        %978 = vmatprep.subr.mxu0 0.0
        %979 = vmatpush2.msra.mxu0 0.0
        %980 = vmatprep.subr.mxu0 0.0
        %981 = vmatpush2.msra.mxu0 0.0
        %982 = vmatprep.subr.mxu0 0.0
        %983 = vmatpush2.msra.mxu0 0.0
        %984 = vmatprep.subr.mxu0 0.0
        %985 = vmatpush2.msra.mxu0 0.0
        %986 = vmatprep.subr.mxu0 0.0
        %987 = vmatpush2.msra.mxu0 0.0
        %988 = vmatprep.subr.mxu0 0.0
        %989 = vmatpush2.msra.mxu0 0.0
        %990 = vmatprep.subr.mxu0 0.0
        %991 = vmatpush2.msra.mxu0 0.0
        %992 = vmatprep.subr.mxu0 0.0
        %993 = vmatpush2.msra.mxu0 0.0
        %994 = vmatprep.subr.mxu0 0.0
        %995 = vmatpush2.msra.mxu0 0.0
        %996 = vmatprep.subr.mxu0 0.0
        %997 = vmatpush2.msra.mxu0 0.0
        %998 = vmatprep.subr.mxu0 0.0
        %999 = vmatpush2.msra.mxu0 0.0
        %1000 = vmatprep.subr.mxu0 0.0
        %1001 = vmatpush2.msra.mxu0 0.0
        %1002 = vmatprep.mubr.f32.mxu0 0.0
        %1003 = vmatmul.mubr.f32.gmra.mxu0 %v933
        %v1004 = vpop.f32.mrf.mxu0
        %v1005 = vadd.f32 %v922, %v1004
        %v1006 = vpop.f32.mrf.mxu0
        %v1007 = vadd.f32 %v924, %v1006
        %1008 = vmatprep.mubr.f32.mxu0 0.0
        %1009 = vmatmul.mubr.f32.gmra.mxu0 %v936
        %v1010 = vpop.f32.mrf.mxu0
        %v1011 = vadd.f32 %v928, %v1010
        %v1012 = vpop.f32.mrf.mxu0
        %v1013 = vadd.f32 %v930, %v1012
        %1014 = vdwg.mxu0
        %1015 = vset.pattern.permute.xlu0 1
        %1016 = vperm.xlu0 %1015, %v814
        %v1017 = vpop.permute.xlu0 %1016
        %1019 = vset.pattern.permute.xlu0 1
        %1020 = vperm.xlu0 %1019, %v815
        %v1021 = vpop.permute.xlu0 %1020
        %v1023 = vmul.f32 %v1005, %v1017
        %v1024 = vmul.f32 %v1007, %v1017
        %v1025 = vmul.f32 %v1011, %v1021
        %v1026 = vmul.f32 %v1013, %v1021
        %1028 = vset.pattern.permute.xlu0 1
        %1029 = vperm.xlu0 %1028, %v834
        %v1030 = vpop.permute.xlu0 %1029
        %1033 = vset.pattern.permute.xlu0 1
        %1034 = vperm.xlu0 %1033, %v835
        %v1035 = vpop.permute.xlu0 %1034
        %v1037 = vadd.f32 %v1023, %v1030
        %v1038 = vadd.f32 %v1024, %v1030
        %v1039 = vadd.f32 %v1025, %v1035
        %v1040 = vadd.f32 %v1026, %v1035
        %v1041 = vmax.f32 %v1037, 0.0
        %v1042 = vmax.f32 %v1038, 0.0
        %v1043 = vmax.f32 %v1039, 0.0
        %v1044 = vmax.f32 %v1040, 0.0
        %v1046 = vsel %vm422, %v836, 0
        %1048 = vmatprep.subr.mxu0 0.0
        %1049 = vmatpush1.msra.mxu0 0.0
        %1050 = vmatprep.subr.mxu0 0.0
        %1051 = vmatpush1.msra.mxu0 0.0
        %1052 = vmatprep.subr.mxu0 0.0
        %1053 = vmatpush1.msra.mxu0 0.0
        %1054 = vmatprep.subr.mxu0 0.0
        %1055 = vmatpush1.msra.mxu0 0.0
        %1056 = vmatprep.subr.mxu0 0.0
        %1057 = vmatpush1.msra.mxu0 0.0
        %1058 = vmatprep.subr.mxu0 0.0
        %1059 = vmatpush1.msra.mxu0 0.0
        %1060 = vmatprep.subr.mxu0 0.0
        %1061 = vmatpush1.msra.mxu0 0.0
        %1062 = vmatprep.subr.mxu0 0.0
        %1063 = vmatpush1.msra.mxu0 0.0
        %1064 = vmatprep.subr.mxu0 0.0
        %1065 = vmatpush1.msra.mxu0 0.0
        %1066 = vmatprep.subr.mxu0 0.0
        %1067 = vmatpush1.msra.mxu0 0.0
        %1068 = vmatprep.subr.mxu0 0.0
        %1069 = vmatpush1.msra.mxu0 0.0
        %1070 = vmatprep.subr.mxu0 0.0
        %1071 = vmatpush1.msra.mxu0 0.0
        %1072 = vmatprep.subr.mxu0 0.0
        %1073 = vmatpush1.msra.mxu0 0.0
        %1074 = vmatprep.subr.mxu0 0.0
        %1075 = vmatpush1.msra.mxu0 0.0
        %1076 = vmatprep.subr.mxu0 %v1044
        %1077 = vmatpush1.msra.mxu0 %v1043
        %1078 = vmatprep.subr.mxu0 %v1042
        %1079 = vmatpush1.msra.mxu0 %v1041
        %1080 = vmatprep.subr.mxu0 0.0
        %1081 = vmatpush2.msra.mxu0 0.0
        %1082 = vmatprep.subr.mxu0 0.0
        %1083 = vmatpush2.msra.mxu0 0.0
        %1084 = vmatprep.subr.mxu0 0.0
        %1085 = vmatpush2.msra.mxu0 0.0
        %1086 = vmatprep.subr.mxu0 0.0
        %1087 = vmatpush2.msra.mxu0 0.0
        %1088 = vmatprep.subr.mxu0 0.0
        %1089 = vmatpush2.msra.mxu0 0.0
        %1090 = vmatprep.subr.mxu0 0.0
        %1091 = vmatpush2.msra.mxu0 0.0
        %1092 = vmatprep.subr.mxu0 0.0
        %1093 = vmatpush2.msra.mxu0 0.0
        %1094 = vmatprep.subr.mxu0 0.0
        %1095 = vmatpush2.msra.mxu0 0.0
        %1096 = vmatprep.subr.mxu0 0.0
        %1097 = vmatpush2.msra.mxu0 0.0
        %1098 = vmatprep.subr.mxu0 0.0
        %1099 = vmatpush2.msra.mxu0 0.0
        %1100 = vmatprep.subr.mxu0 0.0
        %1101 = vmatpush2.msra.mxu0 0.0
        %1102 = vmatprep.subr.mxu0 0.0
        %1103 = vmatpush2.msra.mxu0 0.0
        %1104 = vmatprep.subr.mxu0 0.0
        %1105 = vmatpush2.msra.mxu0 0.0
        %1106 = vmatprep.subr.mxu0 0.0
        %1107 = vmatpush2.msra.mxu0 0.0
        %1108 = vmatprep.subr.mxu0 0.0
        %1109 = vmatpush2.msra.mxu0 0.0
        %1110 = vmatprep.subr.mxu0 0.0
        %1111 = vmatpush2.msra.mxu0 0.0
        %1112 = vmatprep.mubr.f32.mxu0 0.0
        %1113 = vmatmul.mubr.f32.gmra.mxu0 %v1046
        %v1114 = vpop.f32.mrf.mxu0
        %v1115 = vadd.f32 0.0, %v1114
        %v1116 = vpop.f32.mrf.mxu0
        %v1117 = vadd.f32 0.0, %v1116
        %1118 = vdwg.mxu0
        %v1121 = vcombine.low %v1115, %v1117
        %v1123 = vunpack.c.l.s4 1966171168
        %v1124 = vunpack.c.0.s8 %v1123
        %v1125 = vlaneseq
        %v1126 = vshrl.u32 %v1125, 7
        %v1127 = vsub.s32 %v1124, %v1126
        %v1128 = vrot.slane %v1121, %v1127
        %v1130 = vunpack.c.l.s4 1966171168
        %v1131 = vunpack.c.0.s8 %v1130
        %v1132 = vlaneseq
        %v1133 = vshrl.u32 %v1132, 7
        %v1134 = vsub.s32 %v1131, %v1133
        %v1135 = vrot.slane %v1128, %v1134
        %v1137 = vlaneseq
        %vm1138 = vcmp.ge.s32.totalorder %v1137, 0
        %vm1139 = vcmp.lt.s32.totalorder %v1137, 256
        %vm1140 = vmand %vm1138, %vm1139
        %1141 = vst.msk [vmem:[#allocation4] sm:$0x3] %vm1140, %v1135
        %v1142 = vld [vmem:[#allocation4] sm:$0x3]
        %v1144 = vlaneseq
        %v1145 = vshrl.u32 %v1144, 7
        %v1146 = vsub.s32 0, %v1145
        %v1147 = vrot.slane %v1142, %v1146
        %v1148 = vlaneseq
        %v1149 = vshrl.u32 %v1148, 7
        %v1150 = vsub.s32 1, %v1149
        %v1151 = vrot.slane %v1142, %v1150
        %vm1154 = vcmask 1040384
        %v1155 = vsel %vm1154, %v1147, 0.0
        %v1156 = vsel %vm1154, %v1151, 0.0
        %v1157 = vadd.f32 %v1155, %v1156
        %1158 = vadd.xlane.f32.xlu0 %v1157
        %v1159 = vpop.xlane.xlu0 %1158
        %v1160 = vrot.slane %v1159, 4
        %v1161 = vadd.f32 %v1159, %v1160
        %v1162 = vrot.slane %v1161, 2
        %v1163 = vadd.f32 %v1161, %v1162
        %v1164 = vrot.slane %v1163, 1
        %v1165 = vadd.f32 %v1163, %v1164
        %s1166 = vtos %v1165
        %s1167 = smul.f32 %s1166, 0.00390625
        %v1168 = vmul.f32 %v1142, %v1142
        %v1170 = vlaneseq
        %v1171 = vshrl.u32 %v1170, 7
        %v1172 = vsub.s32 0, %v1171
        %v1173 = vrot.slane %v1168, %v1172
        %v1174 = vlaneseq
        %v1175 = vshrl.u32 %v1174, 7
        %v1176 = vsub.s32 1, %v1175
        %v1177 = vrot.slane %v1168, %v1176
        %v1180 = vsel %vm1154, %v1173, 0.0
        %v1181 = vsel %vm1154, %v1177, 0.0
        %v1182 = vadd.f32 %v1180, %v1181
        %1183 = vadd.xlane.f32.xlu0 %v1182
        %v1184 = vpop.xlane.xlu0 %1183
        %v1185 = vrot.slane %v1184, 4
        %v1186 = vadd.f32 %v1184, %v1185
        %v1187 = vrot.slane %v1186, 2
        %v1188 = vadd.f32 %v1186, %v1187
        %v1189 = vrot.slane %v1188, 1
        %v1190 = vadd.f32 %v1188, %v1189
        %s1191 = vtos %v1190
        %s1192 = smul.f32 %s1191, 0.00390625
        %s1193 = smul.f32 %s1167, %s1167
        %s1194 = ssub.f32 %s1192, %s1193
        %s1195 = smax.f32 %s1194, 0.0
        %s1196 = sadd.f32 %s1195, 1e-05
        %v1197 = vstv %s1196
        %v1198 = vrsqrt.pop %v1197
        %s1199 = vtos %v1198
        %s1200 = sld [smem:[#allocation11]]
        %s1201 = smul.f32 %s1199, %s1200
        %s1202 = sld [smem:[#allocation11 + $0x1]]
        %s1203 = smul.f32 %s1167, %s1201
        %s1204 = ssub.f32 %s1202, %s1203
        %v1205 = vstv %s1201
        %v1206 = vmul.f32 %v1142, %v1205
        %v1207 = vstv %s1204
        %v1208 = vadd.f32 %v1206, %v1207
        %v1209 = vxor.u32 %v1208, 2147483648
        %v1210 = vmul.f32 %v1209, 1.442695
        %v1211 = vpow.pop %v1210
        %v1212 = vadd.f32 %v1211, 1.0
        %v1213 = vrcp.pop %v1212
        %v1214 = vmul.f32 1.0, %v1213
        %v1215 = vld [vmem:[%s351] sm:$0xff]
        %v1216 = vld [vmem:[%s351 + $0x8] sm:$0xff]
        %v1217 = vld [vmem:[%s351 + $0x10] sm:$0xff]
        %v1218 = vld [vmem:[%s351 + $0x18] sm:$0xff]
        %v1220 = vlaneseq
        %v1221 = vshrl.u32 %v1220, 7
        %v1222 = vsub.s32 0, %v1221
        %v1223 = vrot.slane %v1214, %v1222
        %v1224 = vlaneseq
        %v1225 = vshrl.u32 %v1224, 7
        %v1226 = vsub.s32 1, %v1225
        %v1227 = vrot.slane %v1214, %v1226
        %v1230 = vmul.f32 %v1215, %v1223
        %v1231 = vmul.f32 %v1216, %v1227
        %v1232 = vmul.f32 %v1217, %v1223
        %v1233 = vmul.f32 %v1218, %v1227
        %1234 = vst [vmem:[%s404] sm:$0xff] %v1230
        %1235 = vst [vmem:[%s404 + $0x8] sm:$0xff] %v1231
        %1236 = vst [vmem:[%s404 + $0x10] sm:$0xff] %v1232
        %1237 = vst [vmem:[%s404 + $0x18] sm:$0xff] %v1233
        %s1238 = sand.u32 %s237, 1
        %s1239 = scalar_lea.sflag [#allocation7], %s1238
        %s1240 = sand.u32 %s237, 1
        %s1241 = smul.addr %s1240, 32
        %s1242 = scalar_lea.vmem [#allocation12], %s1241
        // Predicated region
        $region69: #{tpu_custom_call.1} parent=55 // pred_check
          %p1243 = pneg %p247
        $region70: #{tpu_custom_call.1} parent=55 // pred_check_branch
          %1245 = sbr.rel (%p1243) target = $region72
        $region71: #{tpu_custom_call.1} parent=55 // pred_region
          %s1247 = ssub.s32 512, 512
          %1248 = vsyncadd %s1239, %s1247
          %s1249 = smul.addr %s30, 4
          %s1250 = smul.addr %s1249, 128
          %s1251 = scalar_lea.hbm %s9, %s1250
          %s1252 = sshll.u32 %s1242, 4
          %s1253 = int_to_ptr.vmem [resolvable:$true] %s1252
          %1258 = dma.vmem_to_hbm [thread:$0]  %s1253, 512, %s1251, %s1239, 256, 256, 16
        $region72: #{tpu_custom_call.1} parent=55 // pred_fallthru
          _
      $region56: #{tpu_custom_call.1} parent=5 // pred_fallthru
        _
      %p1259 = scmp.le.s32.totalorder 2, %s25
      // Predicated region
      $region73: #{tpu_custom_call.1} parent=5 // pred_check
        %p1260 = pneg %p1259
      $region74: #{tpu_custom_call.1} parent=5 // pred_check_branch
        %1262 = sbr.rel (%p1260) target = $region76
      $region75: #{tpu_custom_call.1} parent=5 // pred_region
        %s1263 = ssub.s32 %s25, 2
        // Predicated region
        $region77: #{tpu_custom_call.1} parent=75 // pred_check
          %p1264 = pneg %p253
        $region78: #{tpu_custom_call.1} parent=75 // pred_check_branch
          %1266 = sbr.rel (%p1264) target = $region80
        $region79: #{tpu_custom_call.1} parent=75 // pred_region
          %s1267 = sand.u32 %s238, 1
          %s1268 = scalar_lea.sflag [#allocation7], %s1267
          %s1269 = sand.u32 %s238, 1
          %s1270 = smul.addr %s1269, 32
          %s1271 = scalar_lea.vmem [#allocation12], %s1270
          %1272 = dma.done %s1268, 512
        $region80: #{tpu_custom_call.1} parent=75 // pred_fallthru
          _
      $region76: #{tpu_custom_call.1} parent=5 // pred_fallthru
        _
    $region6: #{tpu_custom_call.1} parent=1 // loop_footer
      %s29 = sadd.s32 1, %s25
    $region7: #{tpu_custom_call.1} parent=1 // loop_footer_branch
      %24 = sbr.rel target = $region3
    $region8: #{tpu_custom_call.1} parent=1 // loop_exit
      _
    %1273 = vsyncpa [#allocation6], 1
    %s1274 = scalar_lea.sflag [#allocation6], 1
    %1275 = vsyncpa %s1274, 1
    %1276 = vsyncpa [#allocation10], 1
    %s1277 = scalar_lea.sflag [#allocation10], 1
    %1278 = vsyncpa %s1277, 1
    %1279 = vsyncpa [#allocation7], 1
    %s1280 = scalar_lea.sflag [#allocation7], 1
    %1281 = vsyncpa %s1280, 1
    %1282 = vsyncpa [#allocation8], 1
    %s1283 = scalar_lea.sflag [#allocation8], 1
    %1284 = vsyncpa %s1283, 1

</llo_original>
